<compile_context>
chip_gen: v7x
topology: tpu7x:2x2x1
jax: 0.10.0
libtpu: 0.0.40
codegen_flags: <defaults>
</compile_context>

<pallas_src>
import math

import jax
import jax.numpy as jnp
from jax import lax
from jax.experimental import pallas as pl
from jax.experimental.pallas import tpu as pltpu


def _round_up(v: int, m: int) -> int:
    return ((v + m - 1) // m) * m


def build_position_encoding(max_nodes: int, depth=None) -> jnp.ndarray:
    """Deterministic replica of TreeNodesEncoding.__init__ buffer."""
    d = math.ceil(max_nodes / 4) if depth is None else depth
    d = d + 1 if d % 2 == 1 else d
    position = jnp.arange(max_nodes, dtype=jnp.float32)[:, None]          # (M, 1)
    div_term = jnp.exp(jnp.arange(0, d, 2, dtype=jnp.float32) * (-3.5 / d))
    pe = jnp.zeros((max_nodes, d), dtype=jnp.float32)
    pe = pe.at[:, 0::2].set(jnp.sin(position * div_term))
    pe = pe.at[:, 1::2].set(jnp.cos(position * div_term))
    return pe


def _tree_nodes_encoding_kernel(ts_ref, x_ref, pe_ref, out_ref, acc_ref):
    # ts_ref:  SMEM (1,) int32           effective tree_size (== max_nodes if None)
    # x_ref:   VMEM (N_pad, B) int32     node indices, node-major, resident
    #                                    (constant index_map; padded rows = -1)
    # pe_ref:  VMEM (tile_m, D_pad) f32  current PE slab along the M axis
    # out_ref: VMEM (tile_n, D_pad) f32  output row tile
    # acc_ref: VMEM (tile_n, D_pad) f32  f32 accumulator across the M grid axis
    i = pl.program_id(0)                 # row-tile index ("parallel")
    k = pl.program_id(1)                 # PE-slab index ("arbitrary", reduction)
    tile_n, d_pad = out_ref.shape
    tile_m = pe_ref.shape[0]
    batch = x_ref.shape[1]               # static, small

    @pl.when(k == 0)
    def _():
        acc_ref[...] = jnp.zeros_like(acc_ref)

    # Slice this step's node rows out of the resident index array.
    row0 = pl.multiple_of(i * tile_n, tile_n)
    xv = x_ref[pl.ds(row0, tile_n), :]                               # (tile_n, B)

    # One-hot counts restricted to the current PE slab [k*tile_m, (k+1)*tile_m).
    # First compare initializes counts (no zeros pass); remaining B-1 accumulate.
    col = lax.broadcasted_iota(jnp.int32, (tile_n, tile_m), 1) + k * tile_m
    counts = (xv[:, 0:1] == col).astype(jnp.float32)
    for b in range(1, batch):                                        # full unroll
        counts = counts + (xv[:, b:b + 1] == col).astype(jnp.float32)

    # gather + batch-sum == counts @ PE-slab (MXU, exact f32).  Out-of-range
    # indices in x contribute zero here, whereas PyTorch's pe[x] would raise —
    # callers must pass valid indices (padding rows intentionally use -1).
    acc_ref[...] += jnp.dot(counts, pe_ref[...],
                            preferred_element_type=jnp.float32,
                            precision=lax.Precision.HIGHEST)

    @pl.when(k == pl.num_programs(1) - 1)
    def _():
        # Row mask fused with the 1/B scaling: rows >= tree_size are zeroed.
        rows = lax.broadcasted_iota(jnp.int32, (tile_n, 1), 0) + i * tile_n
        out_ref[...] = jnp.where(rows < ts_ref[0],
                                 acc_ref[...] * (1.0 / batch),
                                 0.0)
    # TODO(synk): train-mode dropout with p > 0 would need pltpu.prng_* here;
    # the module defaults to p=0 (identity), which is what we implement.


def tree_nodes_encoding(x, pe_pad, max_nodes, depth, *, tile_m,
                        tree_size=None, tile_n=None):
    """x: (B, N<=max_nodes) int node indices; pe_pad: pre-padded (M_pad, D_pad) f32."""
    b, n = x.shape
    m_pad, d_pad = pe_pad.shape

    if tile_n is None:
        # 256-row tiles fill the v6e/v7x 256x256 MXU; keep >= 2 row tiles so the
        # "parallel" axis can shard across v7x's two TensorCores when N allows.
        tile_n = 256 if n >= 512 else 128
    n_pad = _round_up(n, tile_n)

    # Node-major layout: node indices live on sublanes, no in-kernel transpose.
    # Padded node slots hold -1 (never match the one-hot iota).
    x_t = jnp.full((n_pad, b), -1, dtype=jnp.int32).at[:n, :].set(
        x.astype(jnp.int32).T)

    # Traceable tree_size (no int() coercion) -> can be a Python int or a jnp scalar.
    ts = jnp.reshape(jnp.asarray(n if tree_size is None else tree_size,
                                 dtype=jnp.int32), (1,))

    grid = (n_pad // tile_n, m_pad // tile_m)

    out = pl.pallas_call(
        _tree_nodes_encoding_kernel,
        out_shape=jax.ShapeDtypeStruct((n_pad, d_pad), jnp.float32),
        grid_spec=pltpu.PrefetchScalarGridSpec(
            num_scalar_prefetch=1,                        # tree_size -> SMEM
            grid=grid,
            in_specs=[
                # Full x array resident in VMEM: constant block index -> single DMA,
                # no per-step descriptor traffic on a nearly-empty (tile_n, B) tile.
                pl.BlockSpec((n_pad, b), lambda i, k, ts_ref: (0, 0)),
                # PE slab walked along the reduction ("arbitrary") grid axis.
                pl.BlockSpec((tile_m, d_pad), lambda i, k, ts_ref: (k, 0)),
            ],
            out_specs=pl.BlockSpec((tile_n, d_pad), lambda i, k, ts_ref: (i, 0)),
            scratch_shapes=[pltpu.VMEM((tile_n, d_pad), jnp.float32)],
        ),
        compiler_params=pltpu.CompilerParams(
            dimension_semantics=("parallel", "arbitrary"),
            vmem_limit_bytes=32 * 1024 * 1024,            # headroom vs v5e's 16 MiB default
        ),
    )(ts, x_t, pe_pad)

    return out[:n, :depth]


class TreeNodesEncodingTPU:
    """Pallas-backed equivalent of the PyTorch TreeNodesEncoding module (p=0)."""

    def __init__(self, max_nodes: int = 200, dropout: float = 0.0, depth=None):
        assert dropout == 0.0, "only the module default dropout p=0 is implemented"
        self.max_nodes = max_nodes
        self.position_encoding = build_position_encoding(max_nodes, depth)  # (M, D)
        self.depth = self.position_encoding.shape[1]

        # Hoisted one-time padding of the PE table (module constant): lane-dense
        # depth, M padded to a multiple of the contraction slab size.
        self.tile_m = 128 if max_nodes <= 128 else 256
        self.m_pad = _round_up(max_nodes, self.tile_m)
        self.d_pad = _round_up(self.depth, 128)
        self.pe_pad = jnp.zeros((self.m_pad, self.d_pad), jnp.float32).at[
            :max_nodes, :self.depth].set(self.position_encoding)

    def __call__(self, x, tree_size=None, tile_n=None):
        # NOTE: at the module's default shapes one call is a single grid step and
        # is launch/DMA-bound; callers with many trees should stack them along the
        # node axis (or add a leading grid axis) to amortize the per-call overhead.
        return tree_nodes_encoding(x, self.pe_pad, self.max_nodes, self.depth,
                                   tile_m=self.tile_m, tree_size=tree_size,
                                   tile_n=tile_n)


if __name__ == "__main__":
    key = jax.random.PRNGKey(0)

    # Small shapes consistent with the module: max_nodes=64 -> depth=16, batch=2.
    max_nodes = 64
    batch = 2
    tree_size = 40

    module = TreeNodesEncodingTPU(max_nodes=max_nodes)
    pe = module.position_encoding                                     # (64, 16)
    x = jax.random.randint(key, (batch, max_nodes), 0, max_nodes, dtype=jnp.int32)

    # Masked path (tree_size passed as a jnp scalar -> traceable).
    te = module(x, tree_size=jnp.int32(tree_size))
    te = jax.block_until_ready(te)

    # Pure-JAX reference of the PyTorch forward (masked path).
    ref = pe[x].sum(axis=0) / batch
    mask = jnp.arange(max_nodes) >= tree_size
    ref = jnp.where(mask[:, None], 0.0, ref)

    assert te.shape == (max_nodes, pe.shape[1])
    assert jnp.allclose(te, ref, atol=1e-5), "kernel output mismatch vs reference"

    # Also exercise the tree_size=None (no mask) path.
    te2 = jax.block_until_ready(module(x, tree_size=None))
    ref2 = pe[x].sum(axis=0) / batch
    assert jnp.allclose(te2, ref2, atol=1e-5), "unmasked path mismatch vs reference"

    print("KERNEL_OK")
</pallas_src>

<mosaic_0001>
module attributes {stable_mosaic.version = 11 : i64} {
  func.func @_tree_nodes_encoding_kernel(%arg0: i32, %arg1: i32, %arg2: memref<1xi32, #tpu.memory_space<smem>>, %arg3: memref<128x2xi32, #tpu.memory_space<vmem>>, %arg4: memref<128x128xf32, #tpu.memory_space<vmem>>, %arg5: memref<128x128xf32, #tpu.memory_space<vmem>>, %arg6: memref<128x128xf32, #tpu.memory_space<vmem>>) attributes {dimension_semantics = [#tpu.dimension_semantics<parallel>, #tpu.dimension_semantics<arbitrary>], iteration_bounds = array<i64: 1, 1>, scalar_prefetch = 1 : i64, scratch_operands = 1 : i64, tpu.core_type = #tpu.core_type<tc>, window_params = [{pipeline_mode = #tpu.pipeline_mode<synchronous>, transform_indices = @transform_0, window_bounds = array<i64: 128, 2>}, {transform_indices = @transform_1, window_bounds = array<i64: 128, 128>}, {transform_indices = @transform_2, window_bounds = array<i64: 128, 128>}]} {
    %c0_i32 = arith.constant 0 : i32
    %0 = arith.cmpi eq, %arg1, %c0_i32 : i32
    %1 = arith.extui %0 : i1 to i32
    %c0_i32_0 = arith.constant 0 : i32
    %2 = arith.cmpi ne, %1, %c0_i32_0 : i32
    scf.if %2 {
      %cst_10 = arith.constant 0.000000e+00 : f32
      %30 = vector.broadcast %cst_10 : f32 to vector<128x128xf32>
      %c0_11 = arith.constant 0 : index
      %c0_12 = arith.constant 0 : index
      %31 = vector.load %arg6[%c0_11, %c0_12] : memref<128x128xf32, #tpu.memory_space<vmem>>, vector<128x128xf32>
      tpu.vector_store %arg6[%c0_11, %c0_12], %30 {strides = array<i32>} : memref<128x128xf32, #tpu.memory_space<vmem>>, vector<128x128xf32>,
    } else {
    }
    %c128_i32 = arith.constant 128 : i32
    %3 = arith.muli %arg0, %c128_i32 : i32
    %4 = tpu.assume_multiple %3, 128 : i32
    %5 = arith.index_cast %4 : i32 to index
    %c0 = arith.constant 0 : index
    %6 = vector.load %arg3[%5, %c0] : memref<128x2xi32, #tpu.memory_space<vmem>>, vector<128x2xi32>
    %7 = tpu.iota {dimensions = array<i32: 1>} : vector<128x128xi32>
    %c128_i32_1 = arith.constant 128 : i32
    %8 = arith.muli %arg1, %c128_i32_1 : i32
    %9 = vector.broadcast %8 : i32 to vector<128x128xi32>
    %10 = arith.addi %7, %9 : vector<128x128xi32>
    %11 = vector.extract_strided_slice %6 {offsets = [0, 0], sizes = [128, 1], strides = [1, 1]} : vector<128x2xi32> to vector<128x1xi32>
    %12 = vector.broadcast %11 : vector<128x1xi32> to vector<128x128xi32>
    %13 = arith.cmpi eq, %12, %10 : vector<128x128xi32>
    %14 = arith.extui %13 : vector<128x128xi1> to vector<128x128xi32>
    %15 = arith.sitofp %14 : vector<128x128xi32> to vector<128x128xf32>
    %16 = vector.extract_strided_slice %6 {offsets = [0, 1], sizes = [128, 1], strides = [1, 1]} : vector<128x2xi32> to vector<128x1xi32>
    %17 = vector.broadcast %16 : vector<128x1xi32> to vector<128x128xi32>
    %18 = arith.cmpi eq, %17, %10 : vector<128x128xi32>
    %19 = arith.extui %18 : vector<128x128xi1> to vector<128x128xi32>
    %20 = arith.sitofp %19 : vector<128x128xi32> to vector<128x128xf32>
    %21 = arith.addf %15, %20 : vector<128x128xf32>
    %c0_2 = arith.constant 0 : index
    %c0_3 = arith.constant 0 : index
    %22 = vector.load %arg6[%c0_2, %c0_3] : memref<128x128xf32, #tpu.memory_space<vmem>>, vector<128x128xf32>
    %c0_4 = arith.constant 0 : index
    %c0_5 = arith.constant 0 : index
    %23 = vector.load %arg4[%c0_4, %c0_5] : memref<128x128xf32, #tpu.memory_space<vmem>>, vector<128x128xf32>
    %cst = arith.constant dense<0.000000e+00> : vector<128x128xf32>
    %24 = tpu.matmul %21, %23, %cst {dimension_numbers = #tpu.dot_dimension_numbers<[1], [0], [0], [1], [0, 0, 1, 1], [], []>, precision = #tpu.contract_precision<fp32>} : vector<128x128xf32>, vector<128x128xf32>, vector<128x128xf32> -> vector<128x128xf32>
    %25 = arith.addf %22, %24 : vector<128x128xf32>
    %c0_6 = arith.constant 0 : index
    %c0_7 = arith.constant 0 : index
    %26 = vector.load %arg6[%c0_6, %c0_7] : memref<128x128xf32, #tpu.memory_space<vmem>>, vector<128x128xf32>
    tpu.vector_store %arg6[%c0_6, %c0_7], %25 {strides = array<i32>} : memref<128x128xf32, #tpu.memory_space<vmem>>, vector<128x128xf32>,
    %c0_i32_8 = arith.constant 0 : i32
    %27 = arith.cmpi eq, %arg1, %c0_i32_8 : i32
    %28 = arith.extui %27 : i1 to i32
    %c0_i32_9 = arith.constant 0 : i32
    %29 = arith.cmpi ne, %28, %c0_i32_9 : i32
    scf.if %29 {
      %30 = tpu.iota {dimensions = array<i32: 0>} : vector<128x1xi32>
      %c128_i32_10 = arith.constant 128 : i32
      %31 = arith.muli %arg0, %c128_i32_10 : i32
      %32 = vector.broadcast %31 : i32 to vector<128x1xi32>
      %33 = arith.addi %30, %32 : vector<128x1xi32>
      %c0_11 = arith.constant 0 : index
      %34 = memref.load %arg2[%c0_11] : memref<1xi32, #tpu.memory_space<smem>>
      %35 = vector.broadcast %34 : i32 to vector<128x1xi32>
      %36 = arith.cmpi slt, %33, %35 : vector<128x1xi32>
      %c0_12 = arith.constant 0 : index
      %c0_13 = arith.constant 0 : index
      %37 = vector.load %arg6[%c0_12, %c0_13] : memref<128x128xf32, #tpu.memory_space<vmem>>, vector<128x128xf32>
      %cst_14 = arith.constant 5.000000e-01 : f32
      %38 = vector.broadcast %cst_14 : f32 to vector<128x128xf32>
      %39 = arith.mulf %37, %38 : vector<128x128xf32>
      %cst_15 = arith.constant 0.000000e+00 : f32
      %40 = vector.shape_cast %36 : vector<128x1xi1> to vector<128x1xi1>
      %41 = vector.broadcast %40 : vector<128x1xi1> to vector<128x128xi1>
      %42 = vector.broadcast %cst_15 : f32 to vector<128x128xf32>
      %43 = arith.select %41, %39, %42 : vector<128x128xi1>, vector<128x128xf32>
      %c0_16 = arith.constant 0 : index
      %c0_17 = arith.constant 0 : index
      %44 = vector.load %arg5[%c0_16, %c0_17] : memref<128x128xf32, #tpu.memory_space<vmem>>, vector<128x128xf32>
      tpu.vector_store %arg5[%c0_16, %c0_17], %43 {strides = array<i32>} : memref<128x128xf32, #tpu.memory_space<vmem>>, vector<128x128xf32>,
    } else {
    }
    return
  }
  func.func @transform_0(%arg0: i32, %arg1: i32, %arg2: memref<1xi32, #tpu.memory_space<smem>>) -> (i32, i32) {
    %c0_i32 = arith.constant 0 : i32
    %c0_i32_0 = arith.constant 0 : i32
    %c0_i32_1 = arith.constant 0 : i32
    return %c0_i32, %c0_i32_0 : i32, i32
  }
  func.func @transform_1(%arg0: i32, %arg1: i32, %arg2: memref<1xi32, #tpu.memory_space<smem>>) -> (i32, i32) {
    %c0_i32 = arith.constant 0 : i32
    %c0_i32_0 = arith.constant 0 : i32
    return %arg1, %c0_i32 : i32, i32
  }
  func.func @transform_2(%arg0: i32, %arg1: i32, %arg2: memref<1xi32, #tpu.memory_space<smem>>) -> (i32, i32) {
    %c0_i32 = arith.constant 0 : i32
    %c0_i32_0 = arith.constant 0 : i32
    return %arg0, %c0_i32 : i32, i32
  }
}

</mosaic_0001>

<llo_original>
// kernel: tpu_custom_call.1
$region0: #{tpu_custom_call.1}
  #allocation0 [shape = 'u32[]', space=smem, size = 0x4, offset = 0x4, fixed_abs, tag = 'smem constant byte address 0x4 - core index']
  #allocation1 [shape = 'u32[144,128]{1,0:T(1,128)}', space=vmem, size = 0x12000, scoped, tag = 'internal scratch']
  #allocation2 [shape = 'f32[128,128]{1,0:T(8,128)}', space=vmem, size = 0x10000, scoped, tag = 'scratch operand']
  #allocation3 [shape = 's32[1]{0}', space=sflag, size = 0x4, scoped, tag = 'scoped memory for tpu_custom_call.1']
  #allocation4 [shape = 's32[1]{0:T(128)S(6)}', space=smem, size = 0x200, scoped, tag = 'prefetched SMEM operand 0']
  %s0 = inlined_call_operand.<no memory space> [shape: s32[1], index: 0, kind: input, shape index: {}]
  %s1 = inlined_call_operand.vmem [shape: s32[128,2], index: 1, kind: input, shape index: {}]
  %s2 = inlined_call_operand.vmem [shape: f32[128,128], index: 2, kind: input, shape index: {}]
  %s3 = inlined_call_operand.hbm [shape: f32[128,128], index: 3, kind: output, shape index: {}]
  %s4 = sld [smem:[#allocation0]]
  $region26: #{tpu_custom_call.1} parent=0
    _
  %s6 = ssub.s32 1, %s4
  %s7 = scalar_select 0, %s6, %s4
  %8 = sst [smem:[#allocation4]] %s0
  $region1: #{tpu_custom_call.1} parent=0
    #allocation5 [shape = 'u8[65536]{0}', space=vmem, size = 0x10000, scoped, tag = 'output window, operand 0, single buffered']
    #allocation6 [shape = 's32[1]{0}', space=sflag, size = 0x4, scoped, tag = 'scoped memory for tpu_custom_call.1']
    %9 = vsyncpa [#allocation6], 0
    // Predicated region
    $region2: #{tpu_custom_call.1} parent=1 // pred_check
      _
    $region3: #{tpu_custom_call.1} parent=1 // pred_check_branch
      %11 = sbr.rel (0) target = $region5
    $region4: #{tpu_custom_call.1} parent=1 // pred_region
      _
    $region5: #{tpu_custom_call.1} parent=1 // pred_fallthru
      _
    // Predicated region
    $region6: #{tpu_custom_call.1} parent=1 // pred_check
      _
    $region7: #{tpu_custom_call.1} parent=1 // pred_check_branch
      %13 = sbr.rel (0) target = $region9
    $region8: #{tpu_custom_call.1} parent=1 // pred_region
      _
    $region9: #{tpu_custom_call.1} parent=1 // pred_fallthru
      _
    %p14 = scmp.eq.s32.totalorder 0, 0
    // Predicated region
    $region10: #{tpu_custom_call.1} parent=1 // pred_check
      %p15 = pneg %p14
    $region11: #{tpu_custom_call.1} parent=1 // pred_check_branch
      %17 = sbr.rel (%p15) target = $region13
    $region12: #{tpu_custom_call.1} parent=1 // pred_region
      %18 = vst [vmem:[#allocation2] sm:$0xff] 0.0
      %19 = vst [vmem:[#allocation2 + $0x8] sm:$0xff] 0.0
      %20 = vst [vmem:[#allocation2 + $0x10] sm:$0xff] 0.0
      %21 = vst [vmem:[#allocation2 + $0x18] sm:$0xff] 0.0
      %22 = vst [vmem:[#allocation2 + $0x20] sm:$0xff] 0.0
      %23 = vst [vmem:[#allocation2 + $0x28] sm:$0xff] 0.0
      %24 = vst [vmem:[#allocation2 + $0x30] sm:$0xff] 0.0
      %25 = vst [vmem:[#allocation2 + $0x38] sm:$0xff] 0.0
      %26 = vst [vmem:[#allocation2 + $0x40] sm:$0xff] 0.0
      %27 = vst [vmem:[#allocation2 + $0x48] sm:$0xff] 0.0
      %28 = vst [vmem:[#allocation2 + $0x50] sm:$0xff] 0.0
      %29 = vst [vmem:[#allocation2 + $0x58] sm:$0xff] 0.0
      %30 = vst [vmem:[#allocation2 + $0x60] sm:$0xff] 0.0
      %31 = vst [vmem:[#allocation2 + $0x68] sm:$0xff] 0.0
      %32 = vst [vmem:[#allocation2 + $0x70] sm:$0xff] 0.0
      %33 = vst [vmem:[#allocation2 + $0x78] sm:$0xff] 0.0
    $region13: #{tpu_custom_call.1} parent=1 // pred_fallthru
      _
    %s34 = smul.u32 0, 128
    %s35 = scalar_lea.vmem %s1, %s34
    %v36 = vld [vmem:[%s35] sm:$0xff]
    %v37 = vld [vmem:[%s35 + $0x8] sm:$0xff]
    %v38 = vld [vmem:[%s35 + $0x10] sm:$0xff]
    %v39 = vld [vmem:[%s35 + $0x18] sm:$0xff]
    %v40 = vld [vmem:[%s35 + $0x20] sm:$0xff]
    %v41 = vld [vmem:[%s35 + $0x28] sm:$0xff]
    %v42 = vld [vmem:[%s35 + $0x30] sm:$0xff]
    %v43 = vld [vmem:[%s35 + $0x38] sm:$0xff]
    %v44 = vld [vmem:[%s35 + $0x40] sm:$0xff]
    %v45 = vld [vmem:[%s35 + $0x48] sm:$0xff]
    %v46 = vld [vmem:[%s35 + $0x50] sm:$0xff]
    %v47 = vld [vmem:[%s35 + $0x58] sm:$0xff]
    %v48 = vld [vmem:[%s35 + $0x60] sm:$0xff]
    %v49 = vld [vmem:[%s35 + $0x68] sm:$0xff]
    %v50 = vld [vmem:[%s35 + $0x70] sm:$0xff]
    %v51 = vld [vmem:[%s35 + $0x78] sm:$0xff]
    %v52 = vlaneseq
    %v53 = vand.u32 %v52, 127
    %s54 = smul.u32 0, 128
    %v55 = vstv %s54
    %v56 = vadd.s32 %v53, %v55
    %57 = vset.pattern.permute.xlu0 0
    %58 = vperm.xlu0 %57, %v36
    %v59 = vpop.permute.xlu0 %58
    %60 = vset.pattern.permute.xlu0 0
    %61 = vperm.xlu0 %60, %v37
    %v62 = vpop.permute.xlu0 %61
    %63 = vset.pattern.permute.xlu0 0
    %64 = vperm.xlu0 %63, %v38
    %v65 = vpop.permute.xlu0 %64
    %66 = vset.pattern.permute.xlu0 0
    %67 = vperm.xlu0 %66, %v39
    %v68 = vpop.permute.xlu0 %67
    %69 = vset.pattern.permute.xlu0 0
    %70 = vperm.xlu0 %69, %v40
    %v71 = vpop.permute.xlu0 %70
    %72 = vset.pattern.permute.xlu0 0
    %73 = vperm.xlu0 %72, %v41
    %v74 = vpop.permute.xlu0 %73
    %75 = vset.pattern.permute.xlu0 0
    %76 = vperm.xlu0 %75, %v42
    %v77 = vpop.permute.xlu0 %76
    %78 = vset.pattern.permute.xlu0 0
    %79 = vperm.xlu0 %78, %v43
    %v80 = vpop.permute.xlu0 %79
    %81 = vset.pattern.permute.xlu0 0
    %82 = vperm.xlu0 %81, %v44
    %v83 = vpop.permute.xlu0 %82
    %84 = vset.pattern.permute.xlu0 0
    %85 = vperm.xlu0 %84, %v45
    %v86 = vpop.permute.xlu0 %85
    %87 = vset.pattern.permute.xlu0 0
    %88 = vperm.xlu0 %87, %v46
    %v89 = vpop.permute.xlu0 %88
    %90 = vset.pattern.permute.xlu0 0
    %91 = vperm.xlu0 %90, %v47
    %v92 = vpop.permute.xlu0 %91
    %93 = vset.pattern.permute.xlu0 0
    %94 = vperm.xlu0 %93, %v48
    %v95 = vpop.permute.xlu0 %94
    %96 = vset.pattern.permute.xlu0 0
    %97 = vperm.xlu0 %96, %v49
    %v98 = vpop.permute.xlu0 %97
    %99 = vset.pattern.permute.xlu0 0
    %100 = vperm.xlu0 %99, %v50
    %v101 = vpop.permute.xlu0 %100
    %102 = vset.pattern.permute.xlu0 0
    %103 = vperm.xlu0 %102, %v51
    %v104 = vpop.permute.xlu0 %103
    %vm105 = vcmp.eq.s32.totalorder %v59, %v56
    %vm106 = vcmp.eq.s32.totalorder %v62, %v56
    %vm107 = vcmp.eq.s32.totalorder %v65, %v56
    %vm108 = vcmp.eq.s32.totalorder %v68, %v56
    %vm109 = vcmp.eq.s32.totalorder %v71, %v56
    %vm110 = vcmp.eq.s32.totalorder %v74, %v56
    %vm111 = vcmp.eq.s32.totalorder %v77, %v56
    %vm112 = vcmp.eq.s32.totalorder %v80, %v56
    %vm113 = vcmp.eq.s32.totalorder %v83, %v56
    %vm114 = vcmp.eq.s32.totalorder %v86, %v56
    %vm115 = vcmp.eq.s32.totalorder %v89, %v56
    %vm116 = vcmp.eq.s32.totalorder %v92, %v56
    %vm117 = vcmp.eq.s32.totalorder %v95, %v56
    %vm118 = vcmp.eq.s32.totalorder %v98, %v56
    %vm119 = vcmp.eq.s32.totalorder %v101, %v56
    %vm120 = vcmp.eq.s32.totalorder %v104, %v56
    %v121 = vsel %vm105, 1, 0
    %v122 = vsel %vm106, 1, 0
    %v123 = vsel %vm107, 1, 0
    %v124 = vsel %vm108, 1, 0
    %v125 = vsel %vm109, 1, 0
    %v126 = vsel %vm110, 1, 0
    %v127 = vsel %vm111, 1, 0
    %v128 = vsel %vm112, 1, 0
    %v129 = vsel %vm113, 1, 0
    %v130 = vsel %vm114, 1, 0
    %v131 = vsel %vm115, 1, 0
    %v132 = vsel %vm116, 1, 0
    %v133 = vsel %vm117, 1, 0
    %v134 = vsel %vm118, 1, 0
    %v135 = vsel %vm119, 1, 0
    %v136 = vsel %vm120, 1, 0
    %v137 = vcvt.s32.f32 %v121
    %v138 = vcvt.s32.f32 %v122
    %v139 = vcvt.s32.f32 %v123
    %v140 = vcvt.s32.f32 %v124
    %v141 = vcvt.s32.f32 %v125
    %v142 = vcvt.s32.f32 %v126
    %v143 = vcvt.s32.f32 %v127
    %v144 = vcvt.s32.f32 %v128
    %v145 = vcvt.s32.f32 %v129
    %v146 = vcvt.s32.f32 %v130
    %v147 = vcvt.s32.f32 %v131
    %v148 = vcvt.s32.f32 %v132
    %v149 = vcvt.s32.f32 %v133
    %v150 = vcvt.s32.f32 %v134
    %v151 = vcvt.s32.f32 %v135
    %v152 = vcvt.s32.f32 %v136
    %153 = vset.pattern.permute.xlu0 1
    %154 = vperm.xlu0 %153, %v36
    %v155 = vpop.permute.xlu0 %154
    %156 = vset.pattern.permute.xlu0 1
    %157 = vperm.xlu0 %156, %v37
    %v158 = vpop.permute.xlu0 %157
    %159 = vset.pattern.permute.xlu0 1
    %160 = vperm.xlu0 %159, %v38
    %v161 = vpop.permute.xlu0 %160
    %162 = vset.pattern.permute.xlu0 1
    %163 = vperm.xlu0 %162, %v39
    %v164 = vpop.permute.xlu0 %163
    %165 = vset.pattern.permute.xlu0 1
    %166 = vperm.xlu0 %165, %v40
    %v167 = vpop.permute.xlu0 %166
    %168 = vset.pattern.permute.xlu0 1
    %169 = vperm.xlu0 %168, %v41
    %v170 = vpop.permute.xlu0 %169
    %171 = vset.pattern.permute.xlu0 1
    %172 = vperm.xlu0 %171, %v42
    %v173 = vpop.permute.xlu0 %172
    %174 = vset.pattern.permute.xlu0 1
    %175 = vperm.xlu0 %174, %v43
    %v176 = vpop.permute.xlu0 %175
    %177 = vset.pattern.permute.xlu0 1
    %178 = vperm.xlu0 %177, %v44
    %v179 = vpop.permute.xlu0 %178
    %180 = vset.pattern.permute.xlu0 1
    %181 = vperm.xlu0 %180, %v45
    %v182 = vpop.permute.xlu0 %181
    %183 = vset.pattern.permute.xlu0 1
    %184 = vperm.xlu0 %183, %v46
    %v185 = vpop.permute.xlu0 %184
    %186 = vset.pattern.permute.xlu0 1
    %187 = vperm.xlu0 %186, %v47
    %v188 = vpop.permute.xlu0 %187
    %189 = vset.pattern.permute.xlu0 1
    %190 = vperm.xlu0 %189, %v48
    %v191 = vpop.permute.xlu0 %190
    %192 = vset.pattern.permute.xlu0 1
    %193 = vperm.xlu0 %192, %v49
    %v194 = vpop.permute.xlu0 %193
    %195 = vset.pattern.permute.xlu0 1
    %196 = vperm.xlu0 %195, %v50
    %v197 = vpop.permute.xlu0 %196
    %198 = vset.pattern.permute.xlu0 1
    %199 = vperm.xlu0 %198, %v51
    %v200 = vpop.permute.xlu0 %199
    %vm201 = vcmp.eq.s32.totalorder %v155, %v56
    %vm202 = vcmp.eq.s32.totalorder %v158, %v56
    %vm203 = vcmp.eq.s32.totalorder %v161, %v56
    %vm204 = vcmp.eq.s32.totalorder %v164, %v56
    %vm205 = vcmp.eq.s32.totalorder %v167, %v56
    %vm206 = vcmp.eq.s32.totalorder %v170, %v56
    %vm207 = vcmp.eq.s32.totalorder %v173, %v56
    %vm208 = vcmp.eq.s32.totalorder %v176, %v56
    %vm209 = vcmp.eq.s32.totalorder %v179, %v56
    %vm210 = vcmp.eq.s32.totalorder %v182, %v56
    %vm211 = vcmp.eq.s32.totalorder %v185, %v56
    %vm212 = vcmp.eq.s32.totalorder %v188, %v56
    %vm213 = vcmp.eq.s32.totalorder %v191, %v56
    %vm214 = vcmp.eq.s32.totalorder %v194, %v56
    %vm215 = vcmp.eq.s32.totalorder %v197, %v56
    %vm216 = vcmp.eq.s32.totalorder %v200, %v56
    %v217 = vsel %vm201, 1, 0
    %v218 = vsel %vm202, 1, 0
    %v219 = vsel %vm203, 1, 0
    %v220 = vsel %vm204, 1, 0
    %v221 = vsel %vm205, 1, 0
    %v222 = vsel %vm206, 1, 0
    %v223 = vsel %vm207, 1, 0
    %v224 = vsel %vm208, 1, 0
    %v225 = vsel %vm209, 1, 0
    %v226 = vsel %vm210, 1, 0
    %v227 = vsel %vm211, 1, 0
    %v228 = vsel %vm212, 1, 0
    %v229 = vsel %vm213, 1, 0
    %v230 = vsel %vm214, 1, 0
    %v231 = vsel %vm215, 1, 0
    %v232 = vsel %vm216, 1, 0
    %v233 = vcvt.s32.f32 %v217
    %v234 = vcvt.s32.f32 %v218
    %v235 = vcvt.s32.f32 %v219
    %v236 = vcvt.s32.f32 %v220
    %v237 = vcvt.s32.f32 %v221
    %v238 = vcvt.s32.f32 %v222
    %v239 = vcvt.s32.f32 %v223
    %v240 = vcvt.s32.f32 %v224
    %v241 = vcvt.s32.f32 %v225
    %v242 = vcvt.s32.f32 %v226
    %v243 = vcvt.s32.f32 %v227
    %v244 = vcvt.s32.f32 %v228
    %v245 = vcvt.s32.f32 %v229
    %v246 = vcvt.s32.f32 %v230
    %v247 = vcvt.s32.f32 %v231
    %v248 = vcvt.s32.f32 %v232
    %v249 = vadd.f32 %v137, %v233
    %v250 = vadd.f32 %v138, %v234
    %v251 = vadd.f32 %v139, %v235
    %v252 = vadd.f32 %v140, %v236
    %v253 = vadd.f32 %v141, %v237
    %v254 = vadd.f32 %v142, %v238
    %v255 = vadd.f32 %v143, %v239
    %v256 = vadd.f32 %v144, %v240
    %v257 = vadd.f32 %v145, %v241
    %v258 = vadd.f32 %v146, %v242
    %v259 = vadd.f32 %v147, %v243
    %v260 = vadd.f32 %v148, %v244
    %v261 = vadd.f32 %v149, %v245
    %v262 = vadd.f32 %v150, %v246
    %v263 = vadd.f32 %v151, %v247
    %v264 = vadd.f32 %v152, %v248
    %v265 = vld [vmem:[#allocation2] sm:$0xff]
    %v266 = vld [vmem:[#allocation2 + $0x8] sm:$0xff]
    %v267 = vld [vmem:[#allocation2 + $0x10] sm:$0xff]
    %v268 = vld [vmem:[#allocation2 + $0x18] sm:$0xff]
    %v269 = vld [vmem:[#allocation2 + $0x20] sm:$0xff]
    %v270 = vld [vmem:[#allocation2 + $0x28] sm:$0xff]
    %v271 = vld [vmem:[#allocation2 + $0x30] sm:$0xff]
    %v272 = vld [vmem:[#allocation2 + $0x38] sm:$0xff]
    %v273 = vld [vmem:[#allocation2 + $0x40] sm:$0xff]
    %v274 = vld [vmem:[#allocation2 + $0x48] sm:$0xff]
    %v275 = vld [vmem:[#allocation2 + $0x50] sm:$0xff]
    %v276 = vld [vmem:[#allocation2 + $0x58] sm:$0xff]
    %v277 = vld [vmem:[#allocation2 + $0x60] sm:$0xff]
    %v278 = vld [vmem:[#allocation2 + $0x68] sm:$0xff]
    %v279 = vld [vmem:[#allocation2 + $0x70] sm:$0xff]
    %v280 = vld [vmem:[#allocation2 + $0x78] sm:$0xff]
    %v281 = vld [vmem:[%s2] sm:$0xff]
    %v282 = vld [vmem:[%s2 + $0x8] sm:$0xff]
    %v283 = vld [vmem:[%s2 + $0x10] sm:$0xff]
    %v284 = vld [vmem:[%s2 + $0x18] sm:$0xff]
    %v285 = vld [vmem:[%s2 + $0x20] sm:$0xff]
    %v286 = vld [vmem:[%s2 + $0x28] sm:$0xff]
    %v287 = vld [vmem:[%s2 + $0x30] sm:$0xff]
    %v288 = vld [vmem:[%s2 + $0x38] sm:$0xff]
    %v289 = vld [vmem:[%s2 + $0x40] sm:$0xff]
    %v290 = vld [vmem:[%s2 + $0x48] sm:$0xff]
    %v291 = vld [vmem:[%s2 + $0x50] sm:$0xff]
    %v292 = vld [vmem:[%s2 + $0x58] sm:$0xff]
    %v293 = vld [vmem:[%s2 + $0x60] sm:$0xff]
    %v294 = vld [vmem:[%s2 + $0x68] sm:$0xff]
    %v295 = vld [vmem:[%s2 + $0x70] sm:$0xff]
    %v296 = vld [vmem:[%s2 + $0x78] sm:$0xff]
    %297 = vmatprep.subr.mxu0 0.0
    %v298 = vand.u32 %v281, 4294901760
    %299 = vmatpush1.msra.mxu0 %v298
    %300 = vmatprep.subr.mxu0 0.0
    %v301 = vand.u32 %v282, 4294901760
    %302 = vmatpush1.msra.mxu0 %v301
    %303 = vmatprep.subr.mxu0 0.0
    %v304 = vand.u32 %v283, 4294901760
    %305 = vmatpush1.msra.mxu0 %v304
    %306 = vmatprep.subr.mxu0 0.0
    %v307 = vand.u32 %v284, 4294901760
    %308 = vmatpush1.msra.mxu0 %v307
    %309 = vmatprep.subr.mxu0 0.0
    %v310 = vand.u32 %v285, 4294901760
    %311 = vmatpush1.msra.mxu0 %v310
    %312 = vmatprep.subr.mxu0 0.0
    %v313 = vand.u32 %v286, 4294901760
    %314 = vmatpush1.msra.mxu0 %v313
    %315 = vmatprep.subr.mxu0 0.0
    %v316 = vand.u32 %v287, 4294901760
    %317 = vmatpush1.msra.mxu0 %v316
    %318 = vmatprep.subr.mxu0 0.0
    %v319 = vand.u32 %v288, 4294901760
    %320 = vmatpush1.msra.mxu0 %v319
    %321 = vmatprep.subr.mxu0 0.0
    %v322 = vand.u32 %v289, 4294901760
    %323 = vmatpush1.msra.mxu0 %v322
    %324 = vmatprep.subr.mxu0 0.0
    %v325 = vand.u32 %v290, 4294901760
    %326 = vmatpush1.msra.mxu0 %v325
    %327 = vmatprep.subr.mxu0 0.0
    %v328 = vand.u32 %v291, 4294901760
    %329 = vmatpush1.msra.mxu0 %v328
    %330 = vmatprep.subr.mxu0 0.0
    %v331 = vand.u32 %v292, 4294901760
    %332 = vmatpush1.msra.mxu0 %v331
    %333 = vmatprep.subr.mxu0 0.0
    %v334 = vand.u32 %v293, 4294901760
    %335 = vmatpush1.msra.mxu0 %v334
    %336 = vmatprep.subr.mxu0 0.0
    %v337 = vand.u32 %v294, 4294901760
    %338 = vmatpush1.msra.mxu0 %v337
    %339 = vmatprep.subr.mxu0 0.0
    %v340 = vand.u32 %v295, 4294901760
    %341 = vmatpush1.msra.mxu0 %v340
    %342 = vmatprep.subr.mxu0 0.0
    %v343 = vand.u32 %v296, 4294901760
    %344 = vmatpush1.msra.mxu0 %v343
    %345 = vmatprep.subr.mxu0 0.0
    %346 = vmatpush1.msra.mxu0 0.0
    %347 = vmatprep.subr.mxu0 0.0
    %348 = vmatpush1.msra.mxu0 0.0
    %349 = vmatprep.subr.mxu0 0.0
    %350 = vmatpush1.msra.mxu0 0.0
    %351 = vmatprep.subr.mxu0 0.0
    %352 = vmatpush1.msra.mxu0 0.0
    %353 = vmatprep.subr.mxu0 0.0
    %354 = vmatpush1.msra.mxu0 0.0
    %355 = vmatprep.subr.mxu0 0.0
    %356 = vmatpush1.msra.mxu0 0.0
    %357 = vmatprep.subr.mxu0 0.0
    %358 = vmatpush1.msra.mxu0 0.0
    %359 = vmatprep.subr.mxu0 0.0
    %360 = vmatpush1.msra.mxu0 0.0
    %361 = vmatprep.subr.mxu0 0.0
    %362 = vmatpush1.msra.mxu0 0.0
    %363 = vmatprep.subr.mxu0 0.0
    %364 = vmatpush1.msra.mxu0 0.0
    %365 = vmatprep.subr.mxu0 0.0
    %366 = vmatpush1.msra.mxu0 0.0
    %367 = vmatprep.subr.mxu0 0.0
    %368 = vmatpush1.msra.mxu0 0.0
    %369 = vmatprep.subr.mxu0 0.0
    %370 = vmatpush1.msra.mxu0 0.0
    %371 = vmatprep.subr.mxu0 0.0
    %372 = vmatpush1.msra.mxu0 0.0
    %373 = vmatprep.subr.mxu0 0.0
    %374 = vmatpush1.msra.mxu0 0.0
    %375 = vmatprep.subr.mxu0 0.0
    %376 = vmatpush1.msra.mxu0 0.0
    %377 = vmatprep.mubr.f32.mxu0 0.0
    %v378 = vand.u32 %v249, 4294901760
    %v379 = vsub.f32 %v249, %v378
    %v380 = vand.u32 %v379, 4294901760
    %v381 = vsub.f32 %v379, %v380
    %v382 = vand.u32 %v381, 4294901760
    %383 = vmatmul.mubr.f32.gmra.mrb[0].mxu0 %v382
    %v384 = vpop.f32.mrb[0].mxu0
    %v385 = vadd.f32 0.0, %v384
    %v386 = vpop.f32.mrb[0].mxu0
    %387 = vmatprep.mubr.f32.mxu0 0.0
    %v388 = vand.u32 %v250, 4294901760
    %v389 = vsub.f32 %v250, %v388
    %v390 = vand.u32 %v389, 4294901760
    %v391 = vsub.f32 %v389, %v390
    %v392 = vand.u32 %v391, 4294901760
    %393 = vmatmul.mubr.f32.gmra.mrb[0].mxu0 %v392
    %v394 = vpop.f32.mrb[0].mxu0
    %v395 = vadd.f32 0.0, %v394
    %v396 = vpop.f32.mrb[0].mxu0
    %397 = vmatprep.mubr.f32.mxu0 0.0
    %v398 = vand.u32 %v251, 4294901760
    %v399 = vsub.f32 %v251, %v398
    %v400 = vand.u32 %v399, 4294901760
    %v401 = vsub.f32 %v399, %v400
    %v402 = vand.u32 %v401, 4294901760
    %403 = vmatmul.mubr.f32.gmra.mrb[0].mxu0 %v402
    %v404 = vpop.f32.mrb[0].mxu0
    %v405 = vadd.f32 0.0, %v404
    %v406 = vpop.f32.mrb[0].mxu0
    %407 = vmatprep.mubr.f32.mxu0 0.0
    %v408 = vand.u32 %v252, 4294901760
    %v409 = vsub.f32 %v252, %v408
    %v410 = vand.u32 %v409, 4294901760
    %v411 = vsub.f32 %v409, %v410
    %v412 = vand.u32 %v411, 4294901760
    %413 = vmatmul.mubr.f32.gmra.mrb[0].mxu0 %v412
    %v414 = vpop.f32.mrb[0].mxu0
    %v415 = vadd.f32 0.0, %v414
    %v416 = vpop.f32.mrb[0].mxu0
    %417 = vmatprep.mubr.f32.mxu0 0.0
    %v418 = vand.u32 %v253, 4294901760
    %v419 = vsub.f32 %v253, %v418
    %v420 = vand.u32 %v419, 4294901760
    %v421 = vsub.f32 %v419, %v420
    %v422 = vand.u32 %v421, 4294901760
    %423 = vmatmul.mubr.f32.gmra.mrb[0].mxu0 %v422
    %v424 = vpop.f32.mrb[0].mxu0
    %v425 = vadd.f32 0.0, %v424
    %v426 = vpop.f32.mrb[0].mxu0
    %427 = vmatprep.mubr.f32.mxu0 0.0
    %v428 = vand.u32 %v254, 4294901760
    %v429 = vsub.f32 %v254, %v428
    %v430 = vand.u32 %v429, 4294901760
    %v431 = vsub.f32 %v429, %v430
    %v432 = vand.u32 %v431, 4294901760
    %433 = vmatmul.mubr.f32.gmra.mrb[0].mxu0 %v432
    %v434 = vpop.f32.mrb[0].mxu0
    %v435 = vadd.f32 0.0, %v434
    %v436 = vpop.f32.mrb[0].mxu0
    %437 = vmatprep.mubr.f32.mxu0 0.0
    %v438 = vand.u32 %v255, 4294901760
    %v439 = vsub.f32 %v255, %v438
    %v440 = vand.u32 %v439, 4294901760
    %v441 = vsub.f32 %v439, %v440
    %v442 = vand.u32 %v441, 4294901760
    %443 = vmatmul.mubr.f32.gmra.mrb[0].mxu0 %v442
    %v444 = vpop.f32.mrb[0].mxu0
    %v445 = vadd.f32 0.0, %v444
    %v446 = vpop.f32.mrb[0].mxu0
    %447 = vmatprep.mubr.f32.mxu0 0.0
    %v448 = vand.u32 %v256, 4294901760
    %v449 = vsub.f32 %v256, %v448
    %v450 = vand.u32 %v449, 4294901760
    %v451 = vsub.f32 %v449, %v450
    %v452 = vand.u32 %v451, 4294901760
    %453 = vmatmul.mubr.f32.gmra.mrb[0].mxu0 %v452
    %v454 = vpop.f32.mrb[0].mxu0
    %v455 = vadd.f32 0.0, %v454
    %v456 = vpop.f32.mrb[0].mxu0
    %457 = vmatprep.mubr.f32.mxu0 0.0
    %v458 = vand.u32 %v257, 4294901760
    %v459 = vsub.f32 %v257, %v458
    %v460 = vand.u32 %v459, 4294901760
    %v461 = vsub.f32 %v459, %v460
    %v462 = vand.u32 %v461, 4294901760
    %463 = vmatmul.mubr.f32.gmra.mrb[0].mxu0 %v462
    %v464 = vpop.f32.mrb[0].mxu0
    %v465 = vadd.f32 0.0, %v464
    %v466 = vpop.f32.mrb[0].mxu0
    %467 = vmatprep.mubr.f32.mxu0 0.0
    %v468 = vand.u32 %v258, 4294901760
    %v469 = vsub.f32 %v258, %v468
    %v470 = vand.u32 %v469, 4294901760
    %v471 = vsub.f32 %v469, %v470
    %v472 = vand.u32 %v471, 4294901760
    %473 = vmatmul.mubr.f32.gmra.mrb[0].mxu0 %v472
    %v474 = vpop.f32.mrb[0].mxu0
    %v475 = vadd.f32 0.0, %v474
    %v476 = vpop.f32.mrb[0].mxu0
    %477 = vmatprep.mubr.f32.mxu0 0.0
    %v478 = vand.u32 %v259, 4294901760
    %v479 = vsub.f32 %v259, %v478
    %v480 = vand.u32 %v479, 4294901760
    %v481 = vsub.f32 %v479, %v480
    %v482 = vand.u32 %v481, 4294901760
    %483 = vmatmul.mubr.f32.gmra.mrb[0].mxu0 %v482
    %v484 = vpop.f32.mrb[0].mxu0
    %v485 = vadd.f32 0.0, %v484
    %v486 = vpop.f32.mrb[0].mxu0
    %487 = vmatprep.mubr.f32.mxu0 0.0
    %v488 = vand.u32 %v260, 4294901760
    %v489 = vsub.f32 %v260, %v488
    %v490 = vand.u32 %v489, 4294901760
    %v491 = vsub.f32 %v489, %v490
    %v492 = vand.u32 %v491, 4294901760
    %493 = vmatmul.mubr.f32.gmra.mrb[0].mxu0 %v492
    %v494 = vpop.f32.mrb[0].mxu0
    %v495 = vadd.f32 0.0, %v494
    %v496 = vpop.f32.mrb[0].mxu0
    %497 = vmatprep.mubr.f32.mxu0 0.0
    %v498 = vand.u32 %v261, 4294901760
    %v499 = vsub.f32 %v261, %v498
    %v500 = vand.u32 %v499, 4294901760
    %v501 = vsub.f32 %v499, %v500
    %v502 = vand.u32 %v501, 4294901760
    %503 = vmatmul.mubr.f32.gmra.mrb[0].mxu0 %v502
    %v504 = vpop.f32.mrb[0].mxu0
    %v505 = vadd.f32 0.0, %v504
    %v506 = vpop.f32.mrb[0].mxu0
    %507 = vmatprep.mubr.f32.mxu0 0.0
    %v508 = vand.u32 %v262, 4294901760
    %v509 = vsub.f32 %v262, %v508
    %v510 = vand.u32 %v509, 4294901760
    %v511 = vsub.f32 %v509, %v510
    %v512 = vand.u32 %v511, 4294901760
    %513 = vmatmul.mubr.f32.gmra.mrb[0].mxu0 %v512
    %v514 = vpop.f32.mrb[0].mxu0
    %v515 = vadd.f32 0.0, %v514
    %v516 = vpop.f32.mrb[0].mxu0
    %517 = vmatprep.mubr.f32.mxu0 0.0
    %v518 = vand.u32 %v263, 4294901760
    %v519 = vsub.f32 %v263, %v518
    %v520 = vand.u32 %v519, 4294901760
    %v521 = vsub.f32 %v519, %v520
    %v522 = vand.u32 %v521, 4294901760
    %523 = vmatmul.mubr.f32.gmra.mrb[0].mxu0 %v522
    %v524 = vpop.f32.mrb[0].mxu0
    %v525 = vadd.f32 0.0, %v524
    %v526 = vpop.f32.mrb[0].mxu0
    %527 = vmatprep.mubr.f32.mxu0 0.0
    %v528 = vand.u32 %v264, 4294901760
    %v529 = vsub.f32 %v264, %v528
    %v530 = vand.u32 %v529, 4294901760
    %v531 = vsub.f32 %v529, %v530
    %v532 = vand.u32 %v531, 4294901760
    %533 = vmatmul.mubr.f32.gmra.mrb[0].mxu0 %v532
    %v534 = vpop.f32.mrb[0].mxu0
    %v535 = vadd.f32 0.0, %v534
    %v536 = vpop.f32.mrb[0].mxu0
    %537 = vdwg.mxu0
    %538 = vmatprep.subr.mxu0 0.0
    %v539 = vand.u32 %v281, 4294901760
    %v540 = vsub.f32 %v281, %v539
    %v541 = vand.u32 %v540, 4294901760
    %v542 = vsub.f32 %v540, %v541
    %v543 = vand.u32 %v542, 4294901760
    %544 = vmatpush1.msra.mxu0 %v543
    %545 = vmatprep.subr.mxu0 0.0
    %v546 = vand.u32 %v282, 4294901760
    %v547 = vsub.f32 %v282, %v546
    %v548 = vand.u32 %v547, 4294901760
    %v549 = vsub.f32 %v547, %v548
    %v550 = vand.u32 %v549, 4294901760
    %551 = vmatpush1.msra.mxu0 %v550
    %552 = vmatprep.subr.mxu0 0.0
    %v553 = vand.u32 %v283, 4294901760
    %v554 = vsub.f32 %v283, %v553
    %v555 = vand.u32 %v554, 4294901760
    %v556 = vsub.f32 %v554, %v555
    %v557 = vand.u32 %v556, 4294901760
    %558 = vmatpush1.msra.mxu0 %v557
    %559 = vmatprep.subr.mxu0 0.0
    %v560 = vand.u32 %v284, 4294901760
    %v561 = vsub.f32 %v284, %v560
    %v562 = vand.u32 %v561, 4294901760
    %v563 = vsub.f32 %v561, %v562
    %v564 = vand.u32 %v563, 4294901760
    %565 = vmatpush1.msra.mxu0 %v564
    %566 = vmatprep.subr.mxu0 0.0
    %v567 = vand.u32 %v285, 4294901760
    %v568 = vsub.f32 %v285, %v567
    %v569 = vand.u32 %v568, 4294901760
    %v570 = vsub.f32 %v568, %v569
    %v571 = vand.u32 %v570, 4294901760
    %572 = vmatpush1.msra.mxu0 %v571
    %573 = vmatprep.subr.mxu0 0.0
    %v574 = vand.u32 %v286, 4294901760
    %v575 = vsub.f32 %v286, %v574
    %v576 = vand.u32 %v575, 4294901760
    %v577 = vsub.f32 %v575, %v576
    %v578 = vand.u32 %v577, 4294901760
    %579 = vmatpush1.msra.mxu0 %v578
    %580 = vmatprep.subr.mxu0 0.0
    %v581 = vand.u32 %v287, 4294901760
    %v582 = vsub.f32 %v287, %v581
    %v583 = vand.u32 %v582, 4294901760
    %v584 = vsub.f32 %v582, %v583
    %v585 = vand.u32 %v584, 4294901760
    %586 = vmatpush1.msra.mxu0 %v585
    %587 = vmatprep.subr.mxu0 0.0
    %v588 = vand.u32 %v288, 4294901760
    %v589 = vsub.f32 %v288, %v588
    %v590 = vand.u32 %v589, 4294901760
    %v591 = vsub.f32 %v589, %v590
    %v592 = vand.u32 %v591, 4294901760
    %593 = vmatpush1.msra.mxu0 %v592
    %594 = vmatprep.subr.mxu0 0.0
    %v595 = vand.u32 %v289, 4294901760
    %v596 = vsub.f32 %v289, %v595
    %v597 = vand.u32 %v596, 4294901760
    %v598 = vsub.f32 %v596, %v597
    %v599 = vand.u32 %v598, 4294901760
    %600 = vmatpush1.msra.mxu0 %v599
    %601 = vmatprep.subr.mxu0 0.0
    %v602 = vand.u32 %v290, 4294901760
    %v603 = vsub.f32 %v290, %v602
    %v604 = vand.u32 %v603, 4294901760
    %v605 = vsub.f32 %v603, %v604
    %v606 = vand.u32 %v605, 4294901760
    %607 = vmatpush1.msra.mxu0 %v606
    %608 = vmatprep.subr.mxu0 0.0
    %v609 = vand.u32 %v291, 4294901760
    %v610 = vsub.f32 %v291, %v609
    %v611 = vand.u32 %v610, 4294901760
    %v612 = vsub.f32 %v610, %v611
    %v613 = vand.u32 %v612, 4294901760
    %614 = vmatpush1.msra.mxu0 %v613
    %615 = vmatprep.subr.mxu0 0.0
    %v616 = vand.u32 %v292, 4294901760
    %v617 = vsub.f32 %v292, %v616
    %v618 = vand.u32 %v617, 4294901760
    %v619 = vsub.f32 %v617, %v618
    %v620 = vand.u32 %v619, 4294901760
    %621 = vmatpush1.msra.mxu0 %v620
    %622 = vmatprep.subr.mxu0 0.0
    %v623 = vand.u32 %v293, 4294901760
    %v624 = vsub.f32 %v293, %v623
    %v625 = vand.u32 %v624, 4294901760
    %v626 = vsub.f32 %v624, %v625
    %v627 = vand.u32 %v626, 4294901760
    %628 = vmatpush1.msra.mxu0 %v627
    %629 = vmatprep.subr.mxu0 0.0
    %v630 = vand.u32 %v294, 4294901760
    %v631 = vsub.f32 %v294, %v630
    %v632 = vand.u32 %v631, 4294901760
    %v633 = vsub.f32 %v631, %v632
    %v634 = vand.u32 %v633, 4294901760
    %635 = vmatpush1.msra.mxu0 %v634
    %636 = vmatprep.subr.mxu0 0.0
    %v637 = vand.u32 %v295, 4294901760
    %v638 = vsub.f32 %v295, %v637
    %v639 = vand.u32 %v638, 4294901760
    %v640 = vsub.f32 %v638, %v639
    %v641 = vand.u32 %v640, 4294901760
    %642 = vmatpush1.msra.mxu0 %v641
    %643 = vmatprep.subr.mxu0 0.0
    %v644 = vand.u32 %v296, 4294901760
    %v645 = vsub.f32 %v296, %v644
    %v646 = vand.u32 %v645, 4294901760
    %v647 = vsub.f32 %v645, %v646
    %v648 = vand.u32 %v647, 4294901760
    %649 = vmatpush1.msra.mxu0 %v648
    %650 = vmatprep.subr.mxu0 0.0
    %651 = vmatpush1.msra.mxu0 0.0
    %652 = vmatprep.subr.mxu0 0.0
    %653 = vmatpush1.msra.mxu0 0.0
    %654 = vmatprep.subr.mxu0 0.0
    %655 = vmatpush1.msra.mxu0 0.0
    %656 = vmatprep.subr.mxu0 0.0
    %657 = vmatpush1.msra.mxu0 0.0
    %658 = vmatprep.subr.mxu0 0.0
    %659 = vmatpush1.msra.mxu0 0.0
    %660 = vmatprep.subr.mxu0 0.0
    %661 = vmatpush1.msra.mxu0 0.0
    %662 = vmatprep.subr.mxu0 0.0
    %663 = vmatpush1.msra.mxu0 0.0
    %664 = vmatprep.subr.mxu0 0.0
    %665 = vmatpush1.msra.mxu0 0.0
    %666 = vmatprep.subr.mxu0 0.0
    %667 = vmatpush1.msra.mxu0 0.0
    %668 = vmatprep.subr.mxu0 0.0
    %669 = vmatpush1.msra.mxu0 0.0
    %670 = vmatprep.subr.mxu0 0.0
    %671 = vmatpush1.msra.mxu0 0.0
    %672 = vmatprep.subr.mxu0 0.0
    %673 = vmatpush1.msra.mxu0 0.0
    %674 = vmatprep.subr.mxu0 0.0
    %675 = vmatpush1.msra.mxu0 0.0
    %676 = vmatprep.subr.mxu0 0.0
    %677 = vmatpush1.msra.mxu0 0.0
    %678 = vmatprep.subr.mxu0 0.0
    %679 = vmatpush1.msra.mxu0 0.0
    %680 = vmatprep.subr.mxu0 0.0
    %681 = vmatpush1.msra.mxu0 0.0
    %682 = vmatprep.mubr.f32.mxu0 0.0
    %v683 = vand.u32 %v249, 4294901760
    %684 = vmatmul.mubr.f32.gmra.mrb[0].mxu0 %v683
    %v685 = vpop.f32.mrb[0].mxu0
    %v686 = vadd.f32 %v385, %v685
    %v687 = vpop.f32.mrb[0].mxu0
    %688 = vmatprep.mubr.f32.mxu0 0.0
    %v689 = vand.u32 %v250, 4294901760
    %690 = vmatmul.mubr.f32.gmra.mrb[0].mxu0 %v689
    %v691 = vpop.f32.mrb[0].mxu0
    %v692 = vadd.f32 %v395, %v691
    %v693 = vpop.f32.mrb[0].mxu0
    %694 = vmatprep.mubr.f32.mxu0 0.0
    %v695 = vand.u32 %v251, 4294901760
    %696 = vmatmul.mubr.f32.gmra.mrb[0].mxu0 %v695
    %v697 = vpop.f32.mrb[0].mxu0
    %v698 = vadd.f32 %v405, %v697
    %v699 = vpop.f32.mrb[0].mxu0
    %700 = vmatprep.mubr.f32.mxu0 0.0
    %v701 = vand.u32 %v252, 4294901760
    %702 = vmatmul.mubr.f32.gmra.mrb[0].mxu0 %v701
    %v703 = vpop.f32.mrb[0].mxu0
    %v704 = vadd.f32 %v415, %v703
    %v705 = vpop.f32.mrb[0].mxu0
    %706 = vmatprep.mubr.f32.mxu0 0.0
    %v707 = vand.u32 %v253, 4294901760
    %708 = vmatmul.mubr.f32.gmra.mrb[0].mxu0 %v707
    %v709 = vpop.f32.mrb[0].mxu0
    %v710 = vadd.f32 %v425, %v709
    %v711 = vpop.f32.mrb[0].mxu0
    %712 = vmatprep.mubr.f32.mxu0 0.0
    %v713 = vand.u32 %v254, 4294901760
    %714 = vmatmul.mubr.f32.gmra.mrb[0].mxu0 %v713
    %v715 = vpop.f32.mrb[0].mxu0
    %v716 = vadd.f32 %v435, %v715
    %v717 = vpop.f32.mrb[0].mxu0
    %718 = vmatprep.mubr.f32.mxu0 0.0
    %v719 = vand.u32 %v255, 4294901760
    %720 = vmatmul.mubr.f32.gmra.mrb[0].mxu0 %v719
    %v721 = vpop.f32.mrb[0].mxu0
    %v722 = vadd.f32 %v445, %v721
    %v723 = vpop.f32.mrb[0].mxu0
    %724 = vmatprep.mubr.f32.mxu0 0.0
    %v725 = vand.u32 %v256, 4294901760
    %726 = vmatmul.mubr.f32.gmra.mrb[0].mxu0 %v725
    %v727 = vpop.f32.mrb[0].mxu0
    %v728 = vadd.f32 %v455, %v727
    %v729 = vpop.f32.mrb[0].mxu0
    %730 = vmatprep.mubr.f32.mxu0 0.0
    %v731 = vand.u32 %v257, 4294901760
    %732 = vmatmul.mubr.f32.gmra.mrb[0].mxu0 %v731
    %v733 = vpop.f32.mrb[0].mxu0
    %v734 = vadd.f32 %v465, %v733
    %v735 = vpop.f32.mrb[0].mxu0
    %736 = vmatprep.mubr.f32.mxu0 0.0
    %v737 = vand.u32 %v258, 4294901760
    %738 = vmatmul.mubr.f32.gmra.mrb[0].mxu0 %v737
    %v739 = vpop.f32.mrb[0].mxu0
    %v740 = vadd.f32 %v475, %v739
    %v741 = vpop.f32.mrb[0].mxu0
    %742 = vmatprep.mubr.f32.mxu0 0.0
    %v743 = vand.u32 %v259, 4294901760
    %744 = vmatmul.mubr.f32.gmra.mrb[0].mxu0 %v743
    %v745 = vpop.f32.mrb[0].mxu0
    %v746 = vadd.f32 %v485, %v745
    %v747 = vpop.f32.mrb[0].mxu0
    %748 = vmatprep.mubr.f32.mxu0 0.0
    %v749 = vand.u32 %v260, 4294901760
    %750 = vmatmul.mubr.f32.gmra.mrb[0].mxu0 %v749
    %v751 = vpop.f32.mrb[0].mxu0
    %v752 = vadd.f32 %v495, %v751
    %v753 = vpop.f32.mrb[0].mxu0
    %754 = vmatprep.mubr.f32.mxu0 0.0
    %v755 = vand.u32 %v261, 4294901760
    %756 = vmatmul.mubr.f32.gmra.mrb[0].mxu0 %v755
    %v757 = vpop.f32.mrb[0].mxu0
    %v758 = vadd.f32 %v505, %v757
    %v759 = vpop.f32.mrb[0].mxu0
    %760 = vmatprep.mubr.f32.mxu0 0.0
    %v761 = vand.u32 %v262, 4294901760
    %762 = vmatmul.mubr.f32.gmra.mrb[0].mxu0 %v761
    %v763 = vpop.f32.mrb[0].mxu0
    %v764 = vadd.f32 %v515, %v763
    %v765 = vpop.f32.mrb[0].mxu0
    %766 = vmatprep.mubr.f32.mxu0 0.0
    %v767 = vand.u32 %v263, 4294901760
    %768 = vmatmul.mubr.f32.gmra.mrb[0].mxu0 %v767
    %v769 = vpop.f32.mrb[0].mxu0
    %v770 = vadd.f32 %v525, %v769
    %v771 = vpop.f32.mrb[0].mxu0
    %772 = vmatprep.mubr.f32.mxu0 0.0
    %v773 = vand.u32 %v264, 4294901760
    %774 = vmatmul.mubr.f32.gmra.mrb[0].mxu0 %v773
    %v775 = vpop.f32.mrb[0].mxu0
    %v776 = vadd.f32 %v535, %v775
    %v777 = vpop.f32.mrb[0].mxu0
    %778 = vdwg.mxu0
    %779 = vmatprep.subr.mxu0 0.0
    %v780 = vand.u32 %v281, 4294901760
    %v781 = vsub.f32 %v281, %v780
    %782 = vmatpush1.msra.mxu0 %v781
    %783 = vmatprep.subr.mxu0 0.0
    %v784 = vand.u32 %v282, 4294901760
    %v785 = vsub.f32 %v282, %v784
    %786 = vmatpush1.msra.mxu0 %v785
    %787 = vmatprep.subr.mxu0 0.0
    %v788 = vand.u32 %v283, 4294901760
    %v789 = vsub.f32 %v283, %v788
    %790 = vmatpush1.msra.mxu0 %v789
    %791 = vmatprep.subr.mxu0 0.0
    %v792 = vand.u32 %v284, 4294901760
    %v793 = vsub.f32 %v284, %v792
    %794 = vmatpush1.msra.mxu0 %v793
    %795 = vmatprep.subr.mxu0 0.0
    %v796 = vand.u32 %v285, 4294901760
    %v797 = vsub.f32 %v285, %v796
    %798 = vmatpush1.msra.mxu0 %v797
    %799 = vmatprep.subr.mxu0 0.0
    %v800 = vand.u32 %v286, 4294901760
    %v801 = vsub.f32 %v286, %v800
    %802 = vmatpush1.msra.mxu0 %v801
    %803 = vmatprep.subr.mxu0 0.0
    %v804 = vand.u32 %v287, 4294901760
    %v805 = vsub.f32 %v287, %v804
    %806 = vmatpush1.msra.mxu0 %v805
    %807 = vmatprep.subr.mxu0 0.0
    %v808 = vand.u32 %v288, 4294901760
    %v809 = vsub.f32 %v288, %v808
    %810 = vmatpush1.msra.mxu0 %v809
    %811 = vmatprep.subr.mxu0 0.0
    %v812 = vand.u32 %v289, 4294901760
    %v813 = vsub.f32 %v289, %v812
    %814 = vmatpush1.msra.mxu0 %v813
    %815 = vmatprep.subr.mxu0 0.0
    %v816 = vand.u32 %v290, 4294901760
    %v817 = vsub.f32 %v290, %v816
    %818 = vmatpush1.msra.mxu0 %v817
    %819 = vmatprep.subr.mxu0 0.0
    %v820 = vand.u32 %v291, 4294901760
    %v821 = vsub.f32 %v291, %v820
    %822 = vmatpush1.msra.mxu0 %v821
    %823 = vmatprep.subr.mxu0 0.0
    %v824 = vand.u32 %v292, 4294901760
    %v825 = vsub.f32 %v292, %v824
    %826 = vmatpush1.msra.mxu0 %v825
    %827 = vmatprep.subr.mxu0 0.0
    %v828 = vand.u32 %v293, 4294901760
    %v829 = vsub.f32 %v293, %v828
    %830 = vmatpush1.msra.mxu0 %v829
    %831 = vmatprep.subr.mxu0 0.0
    %v832 = vand.u32 %v294, 4294901760
    %v833 = vsub.f32 %v294, %v832
    %834 = vmatpush1.msra.mxu0 %v833
    %835 = vmatprep.subr.mxu0 0.0
    %v836 = vand.u32 %v295, 4294901760
    %v837 = vsub.f32 %v295, %v836
    %838 = vmatpush1.msra.mxu0 %v837
    %839 = vmatprep.subr.mxu0 0.0
    %v840 = vand.u32 %v296, 4294901760
    %v841 = vsub.f32 %v296, %v840
    %842 = vmatpush1.msra.mxu0 %v841
    %843 = vmatprep.subr.mxu0 0.0
    %844 = vmatpush1.msra.mxu0 0.0
    %845 = vmatprep.subr.mxu0 0.0
    %846 = vmatpush1.msra.mxu0 0.0
    %847 = vmatprep.subr.mxu0 0.0
    %848 = vmatpush1.msra.mxu0 0.0
    %849 = vmatprep.subr.mxu0 0.0
    %850 = vmatpush1.msra.mxu0 0.0
    %851 = vmatprep.subr.mxu0 0.0
    %852 = vmatpush1.msra.mxu0 0.0
    %853 = vmatprep.subr.mxu0 0.0
    %854 = vmatpush1.msra.mxu0 0.0
    %855 = vmatprep.subr.mxu0 0.0
    %856 = vmatpush1.msra.mxu0 0.0
    %857 = vmatprep.subr.mxu0 0.0
    %858 = vmatpush1.msra.mxu0 0.0
    %859 = vmatprep.subr.mxu0 0.0
    %860 = vmatpush1.msra.mxu0 0.0
    %861 = vmatprep.subr.mxu0 0.0
    %862 = vmatpush1.msra.mxu0 0.0
    %863 = vmatprep.subr.mxu0 0.0
    %864 = vmatpush1.msra.mxu0 0.0
    %865 = vmatprep.subr.mxu0 0.0
    %866 = vmatpush1.msra.mxu0 0.0
    %867 = vmatprep.subr.mxu0 0.0
    %868 = vmatpush1.msra.mxu0 0.0
    %869 = vmatprep.subr.mxu0 0.0
    %870 = vmatpush1.msra.mxu0 0.0
    %871 = vmatprep.subr.mxu0 0.0
    %872 = vmatpush1.msra.mxu0 0.0
    %873 = vmatprep.subr.mxu0 0.0
    %874 = vmatpush1.msra.mxu0 0.0
    %875 = vmatprep.mubr.f32.mxu0 0.0
    %v876 = vand.u32 %v249, 4294901760
    %v877 = vsub.f32 %v249, %v876
    %878 = vmatmul.mubr.f32.gmra.mrb[0].mxu0 %v877
    %v879 = vpop.f32.mrb[0].mxu0
    %v880 = vadd.f32 %v686, %v879
    %v881 = vpop.f32.mrb[0].mxu0
    %882 = vmatprep.mubr.f32.mxu0 0.0
    %v883 = vand.u32 %v250, 4294901760
    %v884 = vsub.f32 %v250, %v883
    %885 = vmatmul.mubr.f32.gmra.mrb[0].mxu0 %v884
    %v886 = vpop.f32.mrb[0].mxu0
    %v887 = vadd.f32 %v692, %v886
    %v888 = vpop.f32.mrb[0].mxu0
    %889 = vmatprep.mubr.f32.mxu0 0.0
    %v890 = vand.u32 %v251, 4294901760
    %v891 = vsub.f32 %v251, %v890
    %892 = vmatmul.mubr.f32.gmra.mrb[0].mxu0 %v891
    %v893 = vpop.f32.mrb[0].mxu0
    %v894 = vadd.f32 %v698, %v893
    %v895 = vpop.f32.mrb[0].mxu0
    %896 = vmatprep.mubr.f32.mxu0 0.0
    %v897 = vand.u32 %v252, 4294901760
    %v898 = vsub.f32 %v252, %v897
    %899 = vmatmul.mubr.f32.gmra.mrb[0].mxu0 %v898
    %v900 = vpop.f32.mrb[0].mxu0
    %v901 = vadd.f32 %v704, %v900
    %v902 = vpop.f32.mrb[0].mxu0
    %903 = vmatprep.mubr.f32.mxu0 0.0
    %v904 = vand.u32 %v253, 4294901760
    %v905 = vsub.f32 %v253, %v904
    %906 = vmatmul.mubr.f32.gmra.mrb[0].mxu0 %v905
    %v907 = vpop.f32.mrb[0].mxu0
    %v908 = vadd.f32 %v710, %v907
    %v909 = vpop.f32.mrb[0].mxu0
    %910 = vmatprep.mubr.f32.mxu0 0.0
    %v911 = vand.u32 %v254, 4294901760
    %v912 = vsub.f32 %v254, %v911
    %913 = vmatmul.mubr.f32.gmra.mrb[0].mxu0 %v912
    %v914 = vpop.f32.mrb[0].mxu0
    %v915 = vadd.f32 %v716, %v914
    %v916 = vpop.f32.mrb[0].mxu0
    %917 = vmatprep.mubr.f32.mxu0 0.0
    %v918 = vand.u32 %v255, 4294901760
    %v919 = vsub.f32 %v255, %v918
    %920 = vmatmul.mubr.f32.gmra.mrb[0].mxu0 %v919
    %v921 = vpop.f32.mrb[0].mxu0
    %v922 = vadd.f32 %v722, %v921
    %v923 = vpop.f32.mrb[0].mxu0
    %924 = vmatprep.mubr.f32.mxu0 0.0
    %v925 = vand.u32 %v256, 4294901760
    %v926 = vsub.f32 %v256, %v925
    %927 = vmatmul.mubr.f32.gmra.mrb[0].mxu0 %v926
    %v928 = vpop.f32.mrb[0].mxu0
    %v929 = vadd.f32 %v728, %v928
    %v930 = vpop.f32.mrb[0].mxu0
    %931 = vmatprep.mubr.f32.mxu0 0.0
    %v932 = vand.u32 %v257, 4294901760
    %v933 = vsub.f32 %v257, %v932
    %934 = vmatmul.mubr.f32.gmra.mrb[0].mxu0 %v933
    %v935 = vpop.f32.mrb[0].mxu0
    %v936 = vadd.f32 %v734, %v935
    %v937 = vpop.f32.mrb[0].mxu0
    %938 = vmatprep.mubr.f32.mxu0 0.0
    %v939 = vand.u32 %v258, 4294901760
    %v940 = vsub.f32 %v258, %v939
    %941 = vmatmul.mubr.f32.gmra.mrb[0].mxu0 %v940
    %v942 = vpop.f32.mrb[0].mxu0
    %v943 = vadd.f32 %v740, %v942
    %v944 = vpop.f32.mrb[0].mxu0
    %945 = vmatprep.mubr.f32.mxu0 0.0
    %v946 = vand.u32 %v259, 4294901760
    %v947 = vsub.f32 %v259, %v946
    %948 = vmatmul.mubr.f32.gmra.mrb[0].mxu0 %v947
    %v949 = vpop.f32.mrb[0].mxu0
    %v950 = vadd.f32 %v746, %v949
    %v951 = vpop.f32.mrb[0].mxu0
    %952 = vmatprep.mubr.f32.mxu0 0.0
    %v953 = vand.u32 %v260, 4294901760
    %v954 = vsub.f32 %v260, %v953
    %955 = vmatmul.mubr.f32.gmra.mrb[0].mxu0 %v954
    %v956 = vpop.f32.mrb[0].mxu0
    %v957 = vadd.f32 %v752, %v956
    %v958 = vpop.f32.mrb[0].mxu0
    %959 = vmatprep.mubr.f32.mxu0 0.0
    %v960 = vand.u32 %v261, 4294901760
    %v961 = vsub.f32 %v261, %v960
    %962 = vmatmul.mubr.f32.gmra.mrb[0].mxu0 %v961
    %v963 = vpop.f32.mrb[0].mxu0
    %v964 = vadd.f32 %v758, %v963
    %v965 = vpop.f32.mrb[0].mxu0
    %966 = vmatprep.mubr.f32.mxu0 0.0
    %v967 = vand.u32 %v262, 4294901760
    %v968 = vsub.f32 %v262, %v967
    %969 = vmatmul.mubr.f32.gmra.mrb[0].mxu0 %v968
    %v970 = vpop.f32.mrb[0].mxu0
    %v971 = vadd.f32 %v764, %v970
    %v972 = vpop.f32.mrb[0].mxu0
    %973 = vmatprep.mubr.f32.mxu0 0.0
    %v974 = vand.u32 %v263, 4294901760
    %v975 = vsub.f32 %v263, %v974
    %976 = vmatmul.mubr.f32.gmra.mrb[0].mxu0 %v975
    %v977 = vpop.f32.mrb[0].mxu0
    %v978 = vadd.f32 %v770, %v977
    %v979 = vpop.f32.mrb[0].mxu0
    %980 = vmatprep.mubr.f32.mxu0 0.0
    %v981 = vand.u32 %v264, 4294901760
    %v982 = vsub.f32 %v264, %v981
    %983 = vmatmul.mubr.f32.gmra.mrb[0].mxu0 %v982
    %v984 = vpop.f32.mrb[0].mxu0
    %v985 = vadd.f32 %v776, %v984
    %v986 = vpop.f32.mrb[0].mxu0
    %987 = vdwg.mxu0
    %988 = vmatprep.subr.mxu0 0.0
    %v989 = vand.u32 %v281, 4294901760
    %990 = vmatpush1.msra.mxu0 %v989
    %991 = vmatprep.subr.mxu0 0.0
    %v992 = vand.u32 %v282, 4294901760
    %993 = vmatpush1.msra.mxu0 %v992
    %994 = vmatprep.subr.mxu0 0.0
    %v995 = vand.u32 %v283, 4294901760
    %996 = vmatpush1.msra.mxu0 %v995
    %997 = vmatprep.subr.mxu0 0.0
    %v998 = vand.u32 %v284, 4294901760
    %999 = vmatpush1.msra.mxu0 %v998
    %1000 = vmatprep.subr.mxu0 0.0
    %v1001 = vand.u32 %v285, 4294901760
    %1002 = vmatpush1.msra.mxu0 %v1001
    %1003 = vmatprep.subr.mxu0 0.0
    %v1004 = vand.u32 %v286, 4294901760
    %1005 = vmatpush1.msra.mxu0 %v1004
    %1006 = vmatprep.subr.mxu0 0.0
    %v1007 = vand.u32 %v287, 4294901760
    %1008 = vmatpush1.msra.mxu0 %v1007
    %1009 = vmatprep.subr.mxu0 0.0
    %v1010 = vand.u32 %v288, 4294901760
    %1011 = vmatpush1.msra.mxu0 %v1010
    %1012 = vmatprep.subr.mxu0 0.0
    %v1013 = vand.u32 %v289, 4294901760
    %1014 = vmatpush1.msra.mxu0 %v1013
    %1015 = vmatprep.subr.mxu0 0.0
    %v1016 = vand.u32 %v290, 4294901760
    %1017 = vmatpush1.msra.mxu0 %v1016
    %1018 = vmatprep.subr.mxu0 0.0
    %v1019 = vand.u32 %v291, 4294901760
    %1020 = vmatpush1.msra.mxu0 %v1019
    %1021 = vmatprep.subr.mxu0 0.0
    %v1022 = vand.u32 %v292, 4294901760
    %1023 = vmatpush1.msra.mxu0 %v1022
    %1024 = vmatprep.subr.mxu0 0.0
    %v1025 = vand.u32 %v293, 4294901760
    %1026 = vmatpush1.msra.mxu0 %v1025
    %1027 = vmatprep.subr.mxu0 0.0
    %v1028 = vand.u32 %v294, 4294901760
    %1029 = vmatpush1.msra.mxu0 %v1028
    %1030 = vmatprep.subr.mxu0 0.0
    %v1031 = vand.u32 %v295, 4294901760
    %1032 = vmatpush1.msra.mxu0 %v1031
    %1033 = vmatprep.subr.mxu0 0.0
    %v1034 = vand.u32 %v296, 4294901760
    %1035 = vmatpush1.msra.mxu0 %v1034
    %1036 = vmatprep.subr.mxu0 0.0
    %1037 = vmatpush1.msra.mxu0 0.0
    %1038 = vmatprep.subr.mxu0 0.0
    %1039 = vmatpush1.msra.mxu0 0.0
    %1040 = vmatprep.subr.mxu0 0.0
    %1041 = vmatpush1.msra.mxu0 0.0
    %1042 = vmatprep.subr.mxu0 0.0
    %1043 = vmatpush1.msra.mxu0 0.0
    %1044 = vmatprep.subr.mxu0 0.0
    %1045 = vmatpush1.msra.mxu0 0.0
    %1046 = vmatprep.subr.mxu0 0.0
    %1047 = vmatpush1.msra.mxu0 0.0
    %1048 = vmatprep.subr.mxu0 0.0
    %1049 = vmatpush1.msra.mxu0 0.0
    %1050 = vmatprep.subr.mxu0 0.0
    %1051 = vmatpush1.msra.mxu0 0.0
    %1052 = vmatprep.subr.mxu0 0.0
    %1053 = vmatpush1.msra.mxu0 0.0
    %1054 = vmatprep.subr.mxu0 0.0
    %1055 = vmatpush1.msra.mxu0 0.0
    %1056 = vmatprep.subr.mxu0 0.0
    %1057 = vmatpush1.msra.mxu0 0.0
    %1058 = vmatprep.subr.mxu0 0.0
    %1059 = vmatpush1.msra.mxu0 0.0
    %1060 = vmatprep.subr.mxu0 0.0
    %1061 = vmatpush1.msra.mxu0 0.0
    %1062 = vmatprep.subr.mxu0 0.0
    %1063 = vmatpush1.msra.mxu0 0.0
    %1064 = vmatprep.subr.mxu0 0.0
    %1065 = vmatpush1.msra.mxu0 0.0
    %1066 = vmatprep.subr.mxu0 0.0
    %1067 = vmatpush1.msra.mxu0 0.0
    %1068 = vmatprep.mubr.f32.mxu0 0.0
    %v1069 = vand.u32 %v249, 4294901760
    %v1070 = vsub.f32 %v249, %v1069
    %v1071 = vand.u32 %v1070, 4294901760
    %1072 = vmatmul.mubr.f32.gmra.mrb[0].mxu0 %v1071
    %v1073 = vpop.f32.mrb[0].mxu0
    %v1074 = vadd.f32 %v880, %v1073
    %v1075 = vpop.f32.mrb[0].mxu0
    %1076 = vmatprep.mubr.f32.mxu0 0.0
    %v1077 = vand.u32 %v250, 4294901760
    %v1078 = vsub.f32 %v250, %v1077
    %v1079 = vand.u32 %v1078, 4294901760
    %1080 = vmatmul.mubr.f32.gmra.mrb[0].mxu0 %v1079
    %v1081 = vpop.f32.mrb[0].mxu0
    %v1082 = vadd.f32 %v887, %v1081
    %v1083 = vpop.f32.mrb[0].mxu0
    %1084 = vmatprep.mubr.f32.mxu0 0.0
    %v1085 = vand.u32 %v251, 4294901760
    %v1086 = vsub.f32 %v251, %v1085
    %v1087 = vand.u32 %v1086, 4294901760
    %1088 = vmatmul.mubr.f32.gmra.mrb[0].mxu0 %v1087
    %v1089 = vpop.f32.mrb[0].mxu0
    %v1090 = vadd.f32 %v894, %v1089
    %v1091 = vpop.f32.mrb[0].mxu0
    %1092 = vmatprep.mubr.f32.mxu0 0.0
    %v1093 = vand.u32 %v252, 4294901760
    %v1094 = vsub.f32 %v252, %v1093
    %v1095 = vand.u32 %v1094, 4294901760
    %1096 = vmatmul.mubr.f32.gmra.mrb[0].mxu0 %v1095
    %v1097 = vpop.f32.mrb[0].mxu0
    %v1098 = vadd.f32 %v901, %v1097
    %v1099 = vpop.f32.mrb[0].mxu0
    %1100 = vmatprep.mubr.f32.mxu0 0.0
    %v1101 = vand.u32 %v253, 4294901760
    %v1102 = vsub.f32 %v253, %v1101
    %v1103 = vand.u32 %v1102, 4294901760
    %1104 = vmatmul.mubr.f32.gmra.mrb[0].mxu0 %v1103
    %v1105 = vpop.f32.mrb[0].mxu0
    %v1106 = vadd.f32 %v908, %v1105
    %v1107 = vpop.f32.mrb[0].mxu0
    %1108 = vmatprep.mubr.f32.mxu0 0.0
    %v1109 = vand.u32 %v254, 4294901760
    %v1110 = vsub.f32 %v254, %v1109
    %v1111 = vand.u32 %v1110, 4294901760
    %1112 = vmatmul.mubr.f32.gmra.mrb[0].mxu0 %v1111
    %v1113 = vpop.f32.mrb[0].mxu0
    %v1114 = vadd.f32 %v915, %v1113
    %v1115 = vpop.f32.mrb[0].mxu0
    %1116 = vmatprep.mubr.f32.mxu0 0.0
    %v1117 = vand.u32 %v255, 4294901760
    %v1118 = vsub.f32 %v255, %v1117
    %v1119 = vand.u32 %v1118, 4294901760
    %1120 = vmatmul.mubr.f32.gmra.mrb[0].mxu0 %v1119
    %v1121 = vpop.f32.mrb[0].mxu0
    %v1122 = vadd.f32 %v922, %v1121
    %v1123 = vpop.f32.mrb[0].mxu0
    %1124 = vmatprep.mubr.f32.mxu0 0.0
    %v1125 = vand.u32 %v256, 4294901760
    %v1126 = vsub.f32 %v256, %v1125
    %v1127 = vand.u32 %v1126, 4294901760
    %1128 = vmatmul.mubr.f32.gmra.mrb[0].mxu0 %v1127
    %v1129 = vpop.f32.mrb[0].mxu0
    %v1130 = vadd.f32 %v929, %v1129
    %v1131 = vpop.f32.mrb[0].mxu0
    %1132 = vmatprep.mubr.f32.mxu0 0.0
    %v1133 = vand.u32 %v257, 4294901760
    %v1134 = vsub.f32 %v257, %v1133
    %v1135 = vand.u32 %v1134, 4294901760
    %1136 = vmatmul.mubr.f32.gmra.mrb[0].mxu0 %v1135
    %v1137 = vpop.f32.mrb[0].mxu0
    %v1138 = vadd.f32 %v936, %v1137
    %v1139 = vpop.f32.mrb[0].mxu0
    %1140 = vmatprep.mubr.f32.mxu0 0.0
    %v1141 = vand.u32 %v258, 4294901760
    %v1142 = vsub.f32 %v258, %v1141
    %v1143 = vand.u32 %v1142, 4294901760
    %1144 = vmatmul.mubr.f32.gmra.mrb[0].mxu0 %v1143
    %v1145 = vpop.f32.mrb[0].mxu0
    %v1146 = vadd.f32 %v943, %v1145
    %v1147 = vpop.f32.mrb[0].mxu0
    %1148 = vmatprep.mubr.f32.mxu0 0.0
    %v1149 = vand.u32 %v259, 4294901760
    %v1150 = vsub.f32 %v259, %v1149
    %v1151 = vand.u32 %v1150, 4294901760
    %1152 = vmatmul.mubr.f32.gmra.mrb[0].mxu0 %v1151
    %v1153 = vpop.f32.mrb[0].mxu0
    %v1154 = vadd.f32 %v950, %v1153
    %v1155 = vpop.f32.mrb[0].mxu0
    %1156 = vmatprep.mubr.f32.mxu0 0.0
    %v1157 = vand.u32 %v260, 4294901760
    %v1158 = vsub.f32 %v260, %v1157
    %v1159 = vand.u32 %v1158, 4294901760
    %1160 = vmatmul.mubr.f32.gmra.mrb[0].mxu0 %v1159
    %v1161 = vpop.f32.mrb[0].mxu0
    %v1162 = vadd.f32 %v957, %v1161
    %v1163 = vpop.f32.mrb[0].mxu0
    %1164 = vmatprep.mubr.f32.mxu0 0.0
    %v1165 = vand.u32 %v261, 4294901760
    %v1166 = vsub.f32 %v261, %v1165
    %v1167 = vand.u32 %v1166, 4294901760
    %1168 = vmatmul.mubr.f32.gmra.mrb[0].mxu0 %v1167
    %v1169 = vpop.f32.mrb[0].mxu0
    %v1170 = vadd.f32 %v964, %v1169
    %v1171 = vpop.f32.mrb[0].mxu0
    %1172 = vmatprep.mubr.f32.mxu0 0.0
    %v1173 = vand.u32 %v262, 4294901760
    %v1174 = vsub.f32 %v262, %v1173
    %v1175 = vand.u32 %v1174, 4294901760
    %1176 = vmatmul.mubr.f32.gmra.mrb[0].mxu0 %v1175
    %v1177 = vpop.f32.mrb[0].mxu0
    %v1178 = vadd.f32 %v971, %v1177
    %v1179 = vpop.f32.mrb[0].mxu0
    %1180 = vmatprep.mubr.f32.mxu0 0.0
    %v1181 = vand.u32 %v263, 4294901760
    %v1182 = vsub.f32 %v263, %v1181
    %v1183 = vand.u32 %v1182, 4294901760
    %1184 = vmatmul.mubr.f32.gmra.mrb[0].mxu0 %v1183
    %v1185 = vpop.f32.mrb[0].mxu0
    %v1186 = vadd.f32 %v978, %v1185
    %v1187 = vpop.f32.mrb[0].mxu0
    %1188 = vmatprep.mubr.f32.mxu0 0.0
    %v1189 = vand.u32 %v264, 4294901760
    %v1190 = vsub.f32 %v264, %v1189
    %v1191 = vand.u32 %v1190, 4294901760
    %1192 = vmatmul.mubr.f32.gmra.mrb[0].mxu0 %v1191
    %v1193 = vpop.f32.mrb[0].mxu0
    %v1194 = vadd.f32 %v985, %v1193
    %v1195 = vpop.f32.mrb[0].mxu0
    %1196 = vdwg.mxu0
    %1197 = vmatprep.subr.mxu0 0.0
    %v1198 = vand.u32 %v281, 4294901760
    %v1199 = vsub.f32 %v281, %v1198
    %v1200 = vand.u32 %v1199, 4294901760
    %1201 = vmatpush1.msra.mxu0 %v1200
    %1202 = vmatprep.subr.mxu0 0.0
    %v1203 = vand.u32 %v282, 4294901760
    %v1204 = vsub.f32 %v282, %v1203
    %v1205 = vand.u32 %v1204, 4294901760
    %1206 = vmatpush1.msra.mxu0 %v1205
    %1207 = vmatprep.subr.mxu0 0.0
    %v1208 = vand.u32 %v283, 4294901760
    %v1209 = vsub.f32 %v283, %v1208
    %v1210 = vand.u32 %v1209, 4294901760
    %1211 = vmatpush1.msra.mxu0 %v1210
    %1212 = vmatprep.subr.mxu0 0.0
    %v1213 = vand.u32 %v284, 4294901760
    %v1214 = vsub.f32 %v284, %v1213
    %v1215 = vand.u32 %v1214, 4294901760
    %1216 = vmatpush1.msra.mxu0 %v1215
    %1217 = vmatprep.subr.mxu0 0.0
    %v1218 = vand.u32 %v285, 4294901760
    %v1219 = vsub.f32 %v285, %v1218
    %v1220 = vand.u32 %v1219, 4294901760
    %1221 = vmatpush1.msra.mxu0 %v1220
    %1222 = vmatprep.subr.mxu0 0.0
    %v1223 = vand.u32 %v286, 4294901760
    %v1224 = vsub.f32 %v286, %v1223
    %v1225 = vand.u32 %v1224, 4294901760
    %1226 = vmatpush1.msra.mxu0 %v1225
    %1227 = vmatprep.subr.mxu0 0.0
    %v1228 = vand.u32 %v287, 4294901760
    %v1229 = vsub.f32 %v287, %v1228
    %v1230 = vand.u32 %v1229, 4294901760
    %1231 = vmatpush1.msra.mxu0 %v1230
    %1232 = vmatprep.subr.mxu0 0.0
    %v1233 = vand.u32 %v288, 4294901760
    %v1234 = vsub.f32 %v288, %v1233
    %v1235 = vand.u32 %v1234, 4294901760
    %1236 = vmatpush1.msra.mxu0 %v1235
    %1237 = vmatprep.subr.mxu0 0.0
    %v1238 = vand.u32 %v289, 4294901760
    %v1239 = vsub.f32 %v289, %v1238
    %v1240 = vand.u32 %v1239, 4294901760
    %1241 = vmatpush1.msra.mxu0 %v1240
    %1242 = vmatprep.subr.mxu0 0.0
    %v1243 = vand.u32 %v290, 4294901760
    %v1244 = vsub.f32 %v290, %v1243
    %v1245 = vand.u32 %v1244, 4294901760
    %1246 = vmatpush1.msra.mxu0 %v1245
    %1247 = vmatprep.subr.mxu0 0.0
    %v1248 = vand.u32 %v291, 4294901760
    %v1249 = vsub.f32 %v291, %v1248
    %v1250 = vand.u32 %v1249, 4294901760
    %1251 = vmatpush1.msra.mxu0 %v1250
    %1252 = vmatprep.subr.mxu0 0.0
    %v1253 = vand.u32 %v292, 4294901760
    %v1254 = vsub.f32 %v292, %v1253
    %v1255 = vand.u32 %v1254, 4294901760
    %1256 = vmatpush1.msra.mxu0 %v1255
    %1257 = vmatprep.subr.mxu0 0.0
    %v1258 = vand.u32 %v293, 4294901760
    %v1259 = vsub.f32 %v293, %v1258
    %v1260 = vand.u32 %v1259, 4294901760
    %1261 = vmatpush1.msra.mxu0 %v1260
    %1262 = vmatprep.subr.mxu0 0.0
    %v1263 = vand.u32 %v294, 4294901760
    %v1264 = vsub.f32 %v294, %v1263
    %v1265 = vand.u32 %v1264, 4294901760
    %1266 = vmatpush1.msra.mxu0 %v1265
    %1267 = vmatprep.subr.mxu0 0.0
    %v1268 = vand.u32 %v295, 4294901760
    %v1269 = vsub.f32 %v295, %v1268
    %v1270 = vand.u32 %v1269, 4294901760
    %1271 = vmatpush1.msra.mxu0 %v1270
    %1272 = vmatprep.subr.mxu0 0.0
    %v1273 = vand.u32 %v296, 4294901760
    %v1274 = vsub.f32 %v296, %v1273
    %v1275 = vand.u32 %v1274, 4294901760
    %1276 = vmatpush1.msra.mxu0 %v1275
    %1277 = vmatprep.subr.mxu0 0.0
    %1278 = vmatpush1.msra.mxu0 0.0
    %1279 = vmatprep.subr.mxu0 0.0
    %1280 = vmatpush1.msra.mxu0 0.0
    %1281 = vmatprep.subr.mxu0 0.0
    %1282 = vmatpush1.msra.mxu0 0.0
    %1283 = vmatprep.subr.mxu0 0.0
    %1284 = vmatpush1.msra.mxu0 0.0
    %1285 = vmatprep.subr.mxu0 0.0
    %1286 = vmatpush1.msra.mxu0 0.0
    %1287 = vmatprep.subr.mxu0 0.0
    %1288 = vmatpush1.msra.mxu0 0.0
    %1289 = vmatprep.subr.mxu0 0.0
    %1290 = vmatpush1.msra.mxu0 0.0
    %1291 = vmatprep.subr.mxu0 0.0
    %1292 = vmatpush1.msra.mxu0 0.0
    %1293 = vmatprep.subr.mxu0 0.0
    %1294 = vmatpush1.msra.mxu0 0.0
    %1295 = vmatprep.subr.mxu0 0.0
    %1296 = vmatpush1.msra.mxu0 0.0
    %1297 = vmatprep.subr.mxu0 0.0
    %1298 = vmatpush1.msra.mxu0 0.0
    %1299 = vmatprep.subr.mxu0 0.0
    %1300 = vmatpush1.msra.mxu0 0.0
    %1301 = vmatprep.subr.mxu0 0.0
    %1302 = vmatpush1.msra.mxu0 0.0
    %1303 = vmatprep.subr.mxu0 0.0
    %1304 = vmatpush1.msra.mxu0 0.0
    %1305 = vmatprep.subr.mxu0 0.0
    %1306 = vmatpush1.msra.mxu0 0.0
    %1307 = vmatprep.subr.mxu0 0.0
    %1308 = vmatpush1.msra.mxu0 0.0
    %1309 = vmatprep.mubr.f32.mxu0 0.0
    %v1310 = vand.u32 %v249, 4294901760
    %1311 = vmatmul.mubr.f32.gmra.mrb[0].mxu0 %v1310
    %v1312 = vpop.f32.mrb[0].mxu0
    %v1313 = vadd.f32 %v1074, %v1312
    %v1314 = vpop.f32.mrb[0].mxu0
    %1315 = vmatprep.mubr.f32.mxu0 0.0
    %v1316 = vand.u32 %v250, 4294901760
    %1317 = vmatmul.mubr.f32.gmra.mrb[0].mxu0 %v1316
    %v1318 = vpop.f32.mrb[0].mxu0
    %v1319 = vadd.f32 %v1082, %v1318
    %v1320 = vpop.f32.mrb[0].mxu0
    %1321 = vmatprep.mubr.f32.mxu0 0.0
    %v1322 = vand.u32 %v251, 4294901760
    %1323 = vmatmul.mubr.f32.gmra.mrb[0].mxu0 %v1322
    %v1324 = vpop.f32.mrb[0].mxu0
    %v1325 = vadd.f32 %v1090, %v1324
    %v1326 = vpop.f32.mrb[0].mxu0
    %1327 = vmatprep.mubr.f32.mxu0 0.0
    %v1328 = vand.u32 %v252, 4294901760
    %1329 = vmatmul.mubr.f32.gmra.mrb[0].mxu0 %v1328
    %v1330 = vpop.f32.mrb[0].mxu0
    %v1331 = vadd.f32 %v1098, %v1330
    %v1332 = vpop.f32.mrb[0].mxu0
    %1333 = vmatprep.mubr.f32.mxu0 0.0
    %v1334 = vand.u32 %v253, 4294901760
    %1335 = vmatmul.mubr.f32.gmra.mrb[0].mxu0 %v1334
    %v1336 = vpop.f32.mrb[0].mxu0
    %v1337 = vadd.f32 %v1106, %v1336
    %v1338 = vpop.f32.mrb[0].mxu0
    %1339 = vmatprep.mubr.f32.mxu0 0.0
    %v1340 = vand.u32 %v254, 4294901760
    %1341 = vmatmul.mubr.f32.gmra.mrb[0].mxu0 %v1340
    %v1342 = vpop.f32.mrb[0].mxu0
    %v1343 = vadd.f32 %v1114, %v1342
    %v1344 = vpop.f32.mrb[0].mxu0
    %1345 = vmatprep.mubr.f32.mxu0 0.0
    %v1346 = vand.u32 %v255, 4294901760
    %1347 = vmatmul.mubr.f32.gmra.mrb[0].mxu0 %v1346
    %v1348 = vpop.f32.mrb[0].mxu0
    %v1349 = vadd.f32 %v1122, %v1348
    %v1350 = vpop.f32.mrb[0].mxu0
    %1351 = vmatprep.mubr.f32.mxu0 0.0
    %v1352 = vand.u32 %v256, 4294901760
    %1353 = vmatmul.mubr.f32.gmra.mrb[0].mxu0 %v1352
    %v1354 = vpop.f32.mrb[0].mxu0
    %v1355 = vadd.f32 %v1130, %v1354
    %v1356 = vpop.f32.mrb[0].mxu0
    %1357 = vmatprep.mubr.f32.mxu0 0.0
    %v1358 = vand.u32 %v257, 4294901760
    %1359 = vmatmul.mubr.f32.gmra.mrb[0].mxu0 %v1358
    %v1360 = vpop.f32.mrb[0].mxu0
    %v1361 = vadd.f32 %v1138, %v1360
    %v1362 = vpop.f32.mrb[0].mxu0
    %1363 = vmatprep.mubr.f32.mxu0 0.0
    %v1364 = vand.u32 %v258, 4294901760
    %1365 = vmatmul.mubr.f32.gmra.mrb[0].mxu0 %v1364
    %v1366 = vpop.f32.mrb[0].mxu0
    %v1367 = vadd.f32 %v1146, %v1366
    %v1368 = vpop.f32.mrb[0].mxu0
    %1369 = vmatprep.mubr.f32.mxu0 0.0
    %v1370 = vand.u32 %v259, 4294901760
    %1371 = vmatmul.mubr.f32.gmra.mrb[0].mxu0 %v1370
    %v1372 = vpop.f32.mrb[0].mxu0
    %v1373 = vadd.f32 %v1154, %v1372
    %v1374 = vpop.f32.mrb[0].mxu0
    %1375 = vmatprep.mubr.f32.mxu0 0.0
    %v1376 = vand.u32 %v260, 4294901760
    %1377 = vmatmul.mubr.f32.gmra.mrb[0].mxu0 %v1376
    %v1378 = vpop.f32.mrb[0].mxu0
    %v1379 = vadd.f32 %v1162, %v1378
    %v1380 = vpop.f32.mrb[0].mxu0
    %1381 = vmatprep.mubr.f32.mxu0 0.0
    %v1382 = vand.u32 %v261, 4294901760
    %1383 = vmatmul.mubr.f32.gmra.mrb[0].mxu0 %v1382
    %v1384 = vpop.f32.mrb[0].mxu0
    %v1385 = vadd.f32 %v1170, %v1384
    %v1386 = vpop.f32.mrb[0].mxu0
    %1387 = vmatprep.mubr.f32.mxu0 0.0
    %v1388 = vand.u32 %v262, 4294901760
    %1389 = vmatmul.mubr.f32.gmra.mrb[0].mxu0 %v1388
    %v1390 = vpop.f32.mrb[0].mxu0
    %v1391 = vadd.f32 %v1178, %v1390
    %v1392 = vpop.f32.mrb[0].mxu0
    %1393 = vmatprep.mubr.f32.mxu0 0.0
    %v1394 = vand.u32 %v263, 4294901760
    %1395 = vmatmul.mubr.f32.gmra.mrb[0].mxu0 %v1394
    %v1396 = vpop.f32.mrb[0].mxu0
    %v1397 = vadd.f32 %v1186, %v1396
    %v1398 = vpop.f32.mrb[0].mxu0
    %1399 = vmatprep.mubr.f32.mxu0 0.0
    %v1400 = vand.u32 %v264, 4294901760
    %1401 = vmatmul.mubr.f32.gmra.mrb[0].mxu0 %v1400
    %v1402 = vpop.f32.mrb[0].mxu0
    %v1403 = vadd.f32 %v1194, %v1402
    %v1404 = vpop.f32.mrb[0].mxu0
    %1405 = vdwg.mxu0
    %1406 = vmatprep.subr.mxu0 0.0
    %v1407 = vand.u32 %v281, 4294901760
    %1408 = vmatpush1.msra.mxu0 %v1407
    %1409 = vmatprep.subr.mxu0 0.0
    %v1410 = vand.u32 %v282, 4294901760
    %1411 = vmatpush1.msra.mxu0 %v1410
    %1412 = vmatprep.subr.mxu0 0.0
    %v1413 = vand.u32 %v283, 4294901760
    %1414 = vmatpush1.msra.mxu0 %v1413
    %1415 = vmatprep.subr.mxu0 0.0
    %v1416 = vand.u32 %v284, 4294901760
    %1417 = vmatpush1.msra.mxu0 %v1416
    %1418 = vmatprep.subr.mxu0 0.0
    %v1419 = vand.u32 %v285, 4294901760
    %1420 = vmatpush1.msra.mxu0 %v1419
    %1421 = vmatprep.subr.mxu0 0.0
    %v1422 = vand.u32 %v286, 4294901760
    %1423 = vmatpush1.msra.mxu0 %v1422
    %1424 = vmatprep.subr.mxu0 0.0
    %v1425 = vand.u32 %v287, 4294901760
    %1426 = vmatpush1.msra.mxu0 %v1425
    %1427 = vmatprep.subr.mxu0 0.0
    %v1428 = vand.u32 %v288, 4294901760
    %1429 = vmatpush1.msra.mxu0 %v1428
    %1430 = vmatprep.subr.mxu0 0.0
    %v1431 = vand.u32 %v289, 4294901760
    %1432 = vmatpush1.msra.mxu0 %v1431
    %1433 = vmatprep.subr.mxu0 0.0
    %v1434 = vand.u32 %v290, 4294901760
    %1435 = vmatpush1.msra.mxu0 %v1434
    %1436 = vmatprep.subr.mxu0 0.0
    %v1437 = vand.u32 %v291, 4294901760
    %1438 = vmatpush1.msra.mxu0 %v1437
    %1439 = vmatprep.subr.mxu0 0.0
    %v1440 = vand.u32 %v292, 4294901760
    %1441 = vmatpush1.msra.mxu0 %v1440
    %1442 = vmatprep.subr.mxu0 0.0
    %v1443 = vand.u32 %v293, 4294901760
    %1444 = vmatpush1.msra.mxu0 %v1443
    %1445 = vmatprep.subr.mxu0 0.0
    %v1446 = vand.u32 %v294, 4294901760
    %1447 = vmatpush1.msra.mxu0 %v1446
    %1448 = vmatprep.subr.mxu0 0.0
    %v1449 = vand.u32 %v295, 4294901760
    %1450 = vmatpush1.msra.mxu0 %v1449
    %1451 = vmatprep.subr.mxu0 0.0
    %v1452 = vand.u32 %v296, 4294901760
    %1453 = vmatpush1.msra.mxu0 %v1452
    %1454 = vmatprep.subr.mxu0 0.0
    %1455 = vmatpush1.msra.mxu0 0.0
    %1456 = vmatprep.subr.mxu0 0.0
    %1457 = vmatpush1.msra.mxu0 0.0
    %1458 = vmatprep.subr.mxu0 0.0
    %1459 = vmatpush1.msra.mxu0 0.0
    %1460 = vmatprep.subr.mxu0 0.0
    %1461 = vmatpush1.msra.mxu0 0.0
    %1462 = vmatprep.subr.mxu0 0.0
    %1463 = vmatpush1.msra.mxu0 0.0
    %1464 = vmatprep.subr.mxu0 0.0
    %1465 = vmatpush1.msra.mxu0 0.0
    %1466 = vmatprep.subr.mxu0 0.0
    %1467 = vmatpush1.msra.mxu0 0.0
    %1468 = vmatprep.subr.mxu0 0.0
    %1469 = vmatpush1.msra.mxu0 0.0
    %1470 = vmatprep.subr.mxu0 0.0
    %1471 = vmatpush1.msra.mxu0 0.0
    %1472 = vmatprep.subr.mxu0 0.0
    %1473 = vmatpush1.msra.mxu0 0.0
    %1474 = vmatprep.subr.mxu0 0.0
    %1475 = vmatpush1.msra.mxu0 0.0
    %1476 = vmatprep.subr.mxu0 0.0
    %1477 = vmatpush1.msra.mxu0 0.0
    %1478 = vmatprep.subr.mxu0 0.0
    %1479 = vmatpush1.msra.mxu0 0.0
    %1480 = vmatprep.subr.mxu0 0.0
    %1481 = vmatpush1.msra.mxu0 0.0
    %1482 = vmatprep.subr.mxu0 0.0
    %1483 = vmatpush1.msra.mxu0 0.0
    %1484 = vmatprep.subr.mxu0 0.0
    %1485 = vmatpush1.msra.mxu0 0.0
    %1486 = vmatprep.mubr.f32.mxu0 0.0
    %v1487 = vand.u32 %v249, 4294901760
    %1488 = vmatmul.mubr.f32.gmra.mrb[0].mxu0 %v1487
    %v1489 = vpop.f32.mrb[0].mxu0
    %v1490 = vadd.f32 %v1313, %v1489
    %v1491 = vpop.f32.mrb[0].mxu0
    %1492 = vmatprep.mubr.f32.mxu0 0.0
    %v1493 = vand.u32 %v250, 4294901760
    %1494 = vmatmul.mubr.f32.gmra.mrb[0].mxu0 %v1493
    %v1495 = vpop.f32.mrb[0].mxu0
    %v1496 = vadd.f32 %v1319, %v1495
    %v1497 = vpop.f32.mrb[0].mxu0
    %1498 = vmatprep.mubr.f32.mxu0 0.0
    %v1499 = vand.u32 %v251, 4294901760
    %1500 = vmatmul.mubr.f32.gmra.mrb[0].mxu0 %v1499
    %v1501 = vpop.f32.mrb[0].mxu0
    %v1502 = vadd.f32 %v1325, %v1501
    %v1503 = vpop.f32.mrb[0].mxu0
    %1504 = vmatprep.mubr.f32.mxu0 0.0
    %v1505 = vand.u32 %v252, 4294901760
    %1506 = vmatmul.mubr.f32.gmra.mrb[0].mxu0 %v1505
    %v1507 = vpop.f32.mrb[0].mxu0
    %v1508 = vadd.f32 %v1331, %v1507
    %v1509 = vpop.f32.mrb[0].mxu0
    %1510 = vmatprep.mubr.f32.mxu0 0.0
    %v1511 = vand.u32 %v253, 4294901760
    %1512 = vmatmul.mubr.f32.gmra.mrb[0].mxu0 %v1511
    %v1513 = vpop.f32.mrb[0].mxu0
    %v1514 = vadd.f32 %v1337, %v1513
    %v1515 = vpop.f32.mrb[0].mxu0
    %1516 = vmatprep.mubr.f32.mxu0 0.0
    %v1517 = vand.u32 %v254, 4294901760
    %1518 = vmatmul.mubr.f32.gmra.mrb[0].mxu0 %v1517
    %v1519 = vpop.f32.mrb[0].mxu0
    %v1520 = vadd.f32 %v1343, %v1519
    %v1521 = vpop.f32.mrb[0].mxu0
    %1522 = vmatprep.mubr.f32.mxu0 0.0
    %v1523 = vand.u32 %v255, 4294901760
    %1524 = vmatmul.mubr.f32.gmra.mrb[0].mxu0 %v1523
    %v1525 = vpop.f32.mrb[0].mxu0
    %v1526 = vadd.f32 %v1349, %v1525
    %v1527 = vpop.f32.mrb[0].mxu0
    %1528 = vmatprep.mubr.f32.mxu0 0.0
    %v1529 = vand.u32 %v256, 4294901760
    %1530 = vmatmul.mubr.f32.gmra.mrb[0].mxu0 %v1529
    %v1531 = vpop.f32.mrb[0].mxu0
    %v1532 = vadd.f32 %v1355, %v1531
    %v1533 = vpop.f32.mrb[0].mxu0
    %1534 = vmatprep.mubr.f32.mxu0 0.0
    %v1535 = vand.u32 %v257, 4294901760
    %1536 = vmatmul.mubr.f32.gmra.mrb[0].mxu0 %v1535
    %v1537 = vpop.f32.mrb[0].mxu0
    %v1538 = vadd.f32 %v1361, %v1537
    %v1539 = vpop.f32.mrb[0].mxu0
    %1540 = vmatprep.mubr.f32.mxu0 0.0
    %v1541 = vand.u32 %v258, 4294901760
    %1542 = vmatmul.mubr.f32.gmra.mrb[0].mxu0 %v1541
    %v1543 = vpop.f32.mrb[0].mxu0
    %v1544 = vadd.f32 %v1367, %v1543
    %v1545 = vpop.f32.mrb[0].mxu0
    %1546 = vmatprep.mubr.f32.mxu0 0.0
    %v1547 = vand.u32 %v259, 4294901760
    %1548 = vmatmul.mubr.f32.gmra.mrb[0].mxu0 %v1547
    %v1549 = vpop.f32.mrb[0].mxu0
    %v1550 = vadd.f32 %v1373, %v1549
    %v1551 = vpop.f32.mrb[0].mxu0
    %1552 = vmatprep.mubr.f32.mxu0 0.0
    %v1553 = vand.u32 %v260, 4294901760
    %1554 = vmatmul.mubr.f32.gmra.mrb[0].mxu0 %v1553
    %v1555 = vpop.f32.mrb[0].mxu0
    %v1556 = vadd.f32 %v1379, %v1555
    %v1557 = vpop.f32.mrb[0].mxu0
    %1558 = vmatprep.mubr.f32.mxu0 0.0
    %v1559 = vand.u32 %v261, 4294901760
    %1560 = vmatmul.mubr.f32.gmra.mrb[0].mxu0 %v1559
    %v1561 = vpop.f32.mrb[0].mxu0
    %v1562 = vadd.f32 %v1385, %v1561
    %v1563 = vpop.f32.mrb[0].mxu0
    %1564 = vmatprep.mubr.f32.mxu0 0.0
    %v1565 = vand.u32 %v262, 4294901760
    %1566 = vmatmul.mubr.f32.gmra.mrb[0].mxu0 %v1565
    %v1567 = vpop.f32.mrb[0].mxu0
    %v1568 = vadd.f32 %v1391, %v1567
    %v1569 = vpop.f32.mrb[0].mxu0
    %1570 = vmatprep.mubr.f32.mxu0 0.0
    %v1571 = vand.u32 %v263, 4294901760
    %1572 = vmatmul.mubr.f32.gmra.mrb[0].mxu0 %v1571
    %v1573 = vpop.f32.mrb[0].mxu0
    %v1574 = vadd.f32 %v1397, %v1573
    %v1575 = vpop.f32.mrb[0].mxu0
    %1576 = vmatprep.mubr.f32.mxu0 0.0
    %v1577 = vand.u32 %v264, 4294901760
    %1578 = vmatmul.mubr.f32.gmra.mrb[0].mxu0 %v1577
    %v1579 = vpop.f32.mrb[0].mxu0
    %v1580 = vadd.f32 %v1403, %v1579
    %v1581 = vpop.f32.mrb[0].mxu0
    %1582 = vdwg.mxu0
    %v1583 = vadd.f32 %v265, %v1490
    %v1584 = vadd.f32 %v266, %v1496
    %v1585 = vadd.f32 %v267, %v1502
    %v1586 = vadd.f32 %v268, %v1508
    %v1587 = vadd.f32 %v269, %v1514
    %v1588 = vadd.f32 %v270, %v1520
    %v1589 = vadd.f32 %v271, %v1526
    %v1590 = vadd.f32 %v272, %v1532
    %v1591 = vadd.f32 %v273, %v1538
    %v1592 = vadd.f32 %v274, %v1544
    %v1593 = vadd.f32 %v275, %v1550
    %v1594 = vadd.f32 %v276, %v1556
    %v1595 = vadd.f32 %v277, %v1562
    %v1596 = vadd.f32 %v278, %v1568
    %v1597 = vadd.f32 %v279, %v1574
    %v1598 = vadd.f32 %v280, %v1580
    %1599 = vst [vmem:[#allocation2] sm:$0xff] %v1583
    %1600 = vst [vmem:[#allocation2 + $0x8] sm:$0xff] %v1584
    %1601 = vst [vmem:[#allocation2 + $0x10] sm:$0xff] %v1585
    %1602 = vst [vmem:[#allocation2 + $0x18] sm:$0xff] %v1586
    %1603 = vst [vmem:[#allocation2 + $0x20] sm:$0xff] %v1587
    %1604 = vst [vmem:[#allocation2 + $0x28] sm:$0xff] %v1588
    %1605 = vst [vmem:[#allocation2 + $0x30] sm:$0xff] %v1589
    %1606 = vst [vmem:[#allocation2 + $0x38] sm:$0xff] %v1590
    %1607 = vst [vmem:[#allocation2 + $0x40] sm:$0xff] %v1591
    %1608 = vst [vmem:[#allocation2 + $0x48] sm:$0xff] %v1592
    %1609 = vst [vmem:[#allocation2 + $0x50] sm:$0xff] %v1593
    %1610 = vst [vmem:[#allocation2 + $0x58] sm:$0xff] %v1594
    %1611 = vst [vmem:[#allocation2 + $0x60] sm:$0xff] %v1595
    %1612 = vst [vmem:[#allocation2 + $0x68] sm:$0xff] %v1596
    %1613 = vst [vmem:[#allocation2 + $0x70] sm:$0xff] %v1597
    %1614 = vst [vmem:[#allocation2 + $0x78] sm:$0xff] %v1598
    // Predicated region
    $region14: #{tpu_custom_call.1} parent=1 // pred_check
      %p1615 = pneg %p14
    $region15: #{tpu_custom_call.1} parent=1 // pred_check_branch
      %1617 = sbr.rel (%p1615) target = $region17
    $region16: #{tpu_custom_call.1} parent=1 // pred_region
      %v1618 = vlaneseq
      %v1619 = vshrl.u32 %v1618, 7
      %v1620 = vadd.s32 %v1619, 8
      %v1621 = vadd.s32 %v1619, 16
      %v1622 = vadd.s32 %v1619, 24
      %v1623 = vadd.s32 %v1619, 32
      %v1624 = vadd.s32 %v1619, 40
      %v1625 = vadd.s32 %v1619, 48
      %v1626 = vadd.s32 %v1619, 56
      %v1627 = vadd.s32 %v1619, 64
      %v1628 = vadd.s32 %v1619, 72
      %v1629 = vadd.s32 %v1619, 80
      %v1630 = vadd.s32 %v1619, 88
      %v1631 = vadd.s32 %v1619, 96
      %v1632 = vadd.s32 %v1619, 104
      %v1633 = vadd.s32 %v1619, 112
      %v1634 = vadd.s32 %v1619, 120
      %v1635 = vstv %s34
      %v1636 = vadd.s32 %v1619, %v1635
      %v1637 = vadd.s32 %v1620, %v1635
      %v1638 = vadd.s32 %v1621, %v1635
      %v1639 = vadd.s32 %v1622, %v1635
      %v1640 = vadd.s32 %v1623, %v1635
      %v1641 = vadd.s32 %v1624, %v1635
      %v1642 = vadd.s32 %v1625, %v1635
      %v1643 = vadd.s32 %v1626, %v1635
      %v1644 = vadd.s32 %v1627, %v1635
      %v1645 = vadd.s32 %v1628, %v1635
      %v1646 = vadd.s32 %v1629, %v1635
      %v1647 = vadd.s32 %v1630, %v1635
      %v1648 = vadd.s32 %v1631, %v1635
      %v1649 = vadd.s32 %v1632, %v1635
      %v1650 = vadd.s32 %v1633, %v1635
      %v1651 = vadd.s32 %v1634, %v1635
      %s1652 = sld [smem:[#allocation4]]
      %v1653 = vstv %s1652
      %vm1654 = vcmp.lt.s32.totalorder %v1636, %v1653
      %vm1655 = vcmp.lt.s32.totalorder %v1637, %v1653
      %vm1656 = vcmp.lt.s32.totalorder %v1638, %v1653
      %vm1657 = vcmp.lt.s32.totalorder %v1639, %v1653
      %vm1658 = vcmp.lt.s32.totalorder %v1640, %v1653
      %vm1659 = vcmp.lt.s32.totalorder %v1641, %v1653
      %vm1660 = vcmp.lt.s32.totalorder %v1642, %v1653
      %vm1661 = vcmp.lt.s32.totalorder %v1643, %v1653
      %vm1662 = vcmp.lt.s32.totalorder %v1644, %v1653
      %vm1663 = vcmp.lt.s32.totalorder %v1645, %v1653
      %vm1664 = vcmp.lt.s32.totalorder %v1646, %v1653
      %vm1665 = vcmp.lt.s32.totalorder %v1647, %v1653
      %vm1666 = vcmp.lt.s32.totalorder %v1648, %v1653
      %vm1667 = vcmp.lt.s32.totalorder %v1649, %v1653
      %vm1668 = vcmp.lt.s32.totalorder %v1650, %v1653
      %vm1669 = vcmp.lt.s32.totalorder %v1651, %v1653
      %v1670 = vld [vmem:[#allocation2] sm:$0xff]
      %v1671 = vld [vmem:[#allocation2 + $0x8] sm:$0xff]
      %v1672 = vld [vmem:[#allocation2 + $0x10] sm:$0xff]
      %v1673 = vld [vmem:[#allocation2 + $0x18] sm:$0xff]
      %v1674 = vld [vmem:[#allocation2 + $0x20] sm:$0xff]
      %v1675 = vld [vmem:[#allocation2 + $0x28] sm:$0xff]
      %v1676 = vld [vmem:[#allocation2 + $0x30] sm:$0xff]
      %v1677 = vld [vmem:[#allocation2 + $0x38] sm:$0xff]
      %v1678 = vld [vmem:[#allocation2 + $0x40] sm:$0xff]
      %v1679 = vld [vmem:[#allocation2 + $0x48] sm:$0xff]
      %v1680 = vld [vmem:[#allocation2 + $0x50] sm:$0xff]
      %v1681 = vld [vmem:[#allocation2 + $0x58] sm:$0xff]
      %v1682 = vld [vmem:[#allocation2 + $0x60] sm:$0xff]
      %v1683 = vld [vmem:[#allocation2 + $0x68] sm:$0xff]
      %v1684 = vld [vmem:[#allocation2 + $0x70] sm:$0xff]
      %v1685 = vld [vmem:[#allocation2 + $0x78] sm:$0xff]
      %v1686 = vmul.f32 %v1670, 0.5
      %v1687 = vmul.f32 %v1671, 0.5
      %v1688 = vmul.f32 %v1672, 0.5
      %v1689 = vmul.f32 %v1673, 0.5
      %v1690 = vmul.f32 %v1674, 0.5
      %v1691 = vmul.f32 %v1675, 0.5
      %v1692 = vmul.f32 %v1676, 0.5
      %v1693 = vmul.f32 %v1677, 0.5
      %v1694 = vmul.f32 %v1678, 0.5
      %v1695 = vmul.f32 %v1679, 0.5
      %v1696 = vmul.f32 %v1680, 0.5
      %v1697 = vmul.f32 %v1681, 0.5
      %v1698 = vmul.f32 %v1682, 0.5
      %v1699 = vmul.f32 %v1683, 0.5
      %v1700 = vmul.f32 %v1684, 0.5
      %v1701 = vmul.f32 %v1685, 0.5
      %v1702 = vsel %vm1654, 1, 0
      %v1703 = vsel %vm1655, 1, 0
      %v1704 = vsel %vm1656, 1, 0
      %v1705 = vsel %vm1657, 1, 0
      %v1706 = vsel %vm1658, 1, 0
      %v1707 = vsel %vm1659, 1, 0
      %v1708 = vsel %vm1660, 1, 0
      %v1709 = vsel %vm1661, 1, 0
      %v1710 = vsel %vm1662, 1, 0
      %v1711 = vsel %vm1663, 1, 0
      %v1712 = vsel %vm1664, 1, 0
      %v1713 = vsel %vm1665, 1, 0
      %v1714 = vsel %vm1666, 1, 0
      %v1715 = vsel %vm1667, 1, 0
      %v1716 = vsel %vm1668, 1, 0
      %v1717 = vsel %vm1669, 1, 0
      %vm1718 = vcmp.eq.s32.totalorder %v1702, 1
      %vm1719 = vcmp.eq.s32.totalorder %v1703, 1
      %vm1720 = vcmp.eq.s32.totalorder %v1704, 1
      %vm1721 = vcmp.eq.s32.totalorder %v1705, 1
      %vm1722 = vcmp.eq.s32.totalorder %v1706, 1
      %vm1723 = vcmp.eq.s32.totalorder %v1707, 1
      %vm1724 = vcmp.eq.s32.totalorder %v1708, 1
      %vm1725 = vcmp.eq.s32.totalorder %v1709, 1
      %vm1726 = vcmp.eq.s32.totalorder %v1710, 1
      %vm1727 = vcmp.eq.s32.totalorder %v1711, 1
      %vm1728 = vcmp.eq.s32.totalorder %v1712, 1
      %vm1729 = vcmp.eq.s32.totalorder %v1713, 1
      %vm1730 = vcmp.eq.s32.totalorder %v1714, 1
      %vm1731 = vcmp.eq.s32.totalorder %v1715, 1
      %vm1732 = vcmp.eq.s32.totalorder %v1716, 1
      %vm1733 = vcmp.eq.s32.totalorder %v1717, 1
      %v1734 = vsel %vm1718, %v1686, 0.0
      %v1735 = vsel %vm1719, %v1687, 0.0
      %v1736 = vsel %vm1720, %v1688, 0.0
      %v1737 = vsel %vm1721, %v1689, 0.0
      %v1738 = vsel %vm1722, %v1690, 0.0
      %v1739 = vsel %vm1723, %v1691, 0.0
      %v1740 = vsel %vm1724, %v1692, 0.0
      %v1741 = vsel %vm1725, %v1693, 0.0
      %v1742 = vsel %vm1726, %v1694, 0.0
      %v1743 = vsel %vm1727, %v1695, 0.0
      %v1744 = vsel %vm1728, %v1696, 0.0
      %v1745 = vsel %vm1729, %v1697, 0.0
      %v1746 = vsel %vm1730, %v1698, 0.0
      %v1747 = vsel %vm1731, %v1699, 0.0
      %v1748 = vsel %vm1732, %v1700, 0.0
      %v1749 = vsel %vm1733, %v1701, 0.0
      %1750 = vst [vmem:[#allocation5] sm:$0xff] %v1734
      %1751 = vst [vmem:[#allocation5 + $0x8] sm:$0xff] %v1735
      %1752 = vst [vmem:[#allocation5 + $0x10] sm:$0xff] %v1736
      %1753 = vst [vmem:[#allocation5 + $0x18] sm:$0xff] %v1737
      %1754 = vst [vmem:[#allocation5 + $0x20] sm:$0xff] %v1738
      %1755 = vst [vmem:[#allocation5 + $0x28] sm:$0xff] %v1739
      %1756 = vst [vmem:[#allocation5 + $0x30] sm:$0xff] %v1740
      %1757 = vst [vmem:[#allocation5 + $0x38] sm:$0xff] %v1741
      %1758 = vst [vmem:[#allocation5 + $0x40] sm:$0xff] %v1742
      %1759 = vst [vmem:[#allocation5 + $0x48] sm:$0xff] %v1743
      %1760 = vst [vmem:[#allocation5 + $0x50] sm:$0xff] %v1744
      %1761 = vst [vmem:[#allocation5 + $0x58] sm:$0xff] %v1745
      %1762 = vst [vmem:[#allocation5 + $0x60] sm:$0xff] %v1746
      %1763 = vst [vmem:[#allocation5 + $0x68] sm:$0xff] %v1747
      %1764 = vst [vmem:[#allocation5 + $0x70] sm:$0xff] %v1748
      %1765 = vst [vmem:[#allocation5 + $0x78] sm:$0xff] %v1749
    $region17: #{tpu_custom_call.1} parent=1 // pred_fallthru
      _
    // Predicated region
    $region18: #{tpu_custom_call.1} parent=1 // pred_check
      _
    $region19: #{tpu_custom_call.1} parent=1 // pred_check_branch
      %1767 = sbr.rel (0) target = $region21
    $region20: #{tpu_custom_call.1} parent=1 // pred_region
      %s1769 = ssub.s32 2048, 2048
      %1770 = vsyncadd [#allocation6], %s1769
      %s1771 = sshll.u32 [#allocation5], 4
      %s1772 = int_to_ptr.vmem [resolvable:$true] %s1771
      %1777 = dma.vmem_to_hbm [thread:$0]  %s1772, 2048, %s3, [#allocation6], 128, 128, 8
    $region21: #{tpu_custom_call.1} parent=1 // pred_fallthru
      _
    // Predicated region
    $region22: #{tpu_custom_call.1} parent=1 // pred_check
      _
    $region23: #{tpu_custom_call.1} parent=1 // pred_check_branch
      %1779 = sbr.rel (0) target = $region25
    $region24: #{tpu_custom_call.1} parent=1 // pred_region
      %1780 = dma.done [#allocation6], 2048
    $region25: #{tpu_custom_call.1} parent=1 // pred_fallthru
      _
    %1781 = vsyncpa [#allocation6], 1

</llo_original>
